<compile_context>
chip_gen: v6e
topology: v6e:2x2x1
jax: 0.10.0
libtpu: 0.0.40
codegen_flags: <defaults>
</compile_context>

<pallas_src>
import jax
import jax.numpy as jnp
from jax.experimental import pallas as pl
from jax.experimental.pallas import tpu as pltpu

D = 40
EPS = 1e-5
MAX_TILE_N = 4096  # rows per grid step; multiple of 8; VMEM-safe on all generations


def _round_up(a, m):
    return ((a + m - 1) // m) * m


def residual_add_dec2_kernel(x_ref, wc_ref, ones_ref, b_ref, o_ref):
    # x_ref: (TILE_N, D) rows
    # wc_ref: (D, D) mean-centered+affine-folded weight  Wc = diag(g)@W - ones(D,1)@colsum(diag(g)@W)/D
    # ones_ref: (D, D) all entries 1/D   (mean / E[x^2] broadcaster)
    # b_ref: (1, D) folded bias          b' = beta@W + b
    x = x_ref[...].astype(jnp.float32)

    # MXU-offloaded LayerNorm statistics: outputs arrive lane-broadcast over all D lanes,
    # so there is zero XLU (cross-lane) work in this kernel.
    xwc = jnp.dot(x, wc_ref[...],
                  precision=jax.lax.Precision.HIGHEST,
                  preferred_element_type=jnp.float32)          # == (x - mu) @ W'
    mu = jnp.dot(x, ones_ref[...],
                 precision=jax.lax.Precision.HIGHEST,
                 preferred_element_type=jnp.float32)           # per-row mean, lane-broadcast
    ex2 = jnp.dot(x * x, ones_ref[...],
                  precision=jax.lax.Precision.HIGHEST,
                  preferred_element_type=jnp.float32)          # per-row E[x^2], lane-broadcast

    # Biased variance (matches PyTorch LayerNorm); rsqrt goes to the EUP (free slot).
    rstd = jax.lax.rsqrt(ex2 - mu * mu + EPS)

    # out = LayerNorm(x) @ W' + b' + residual
    o_ref[...] = (rstd * xwc + b_ref[...] + x).astype(o_ref.dtype)


def residual_add_dec2(x, y, w, b, gamma, beta):
    """x: (B, S, D) float32; y passed through unchanged. Returns (out, y)."""
    B, S, d = x.shape
    assert d == D
    N = B * S
    x2 = x.reshape(N, D)

    # Fold LayerNorm affine into the Linear (exact):  (xn*g + beta)@W + b = xn@W' + b'
    w_f = (gamma.reshape(D, 1) * w).astype(jnp.float32)              # diag(gamma) @ W
    b_f = (beta.reshape(1, D) @ w + b.reshape(1, D)).astype(jnp.float32)  # beta @ W + b
    # Fold the mean subtraction into the weight:  (x - mu) @ W' = x @ Wc
    w_c = (w_f - jnp.ones((D, 1), jnp.float32) *
           (jnp.sum(w_f, axis=0, keepdims=True) / D)).astype(jnp.float32)
    ones_dd = jnp.full((D, D), 1.0 / D, dtype=jnp.float32)

    # Row tiling: multiple of 8 (sublane constraint), capped for VMEM safety, and split
    # into >= 2 tiles whenever possible so both v7x TensorCores participate.
    N8 = _round_up(N, 8)
    if 16 <= N8 <= MAX_TILE_N:
        tile_n = _round_up((N8 + 1) // 2, 8)
    else:
        tile_n = min(MAX_TILE_N, N8)
    n_pad = _round_up(N, tile_n)
    if n_pad != N:
        # Padded rows are all-zero: mu = E[x^2] = 0, rstd = rsqrt(eps) finite,
        # output = b' on those rows; they are sliced off below.
        x2 = jnp.pad(x2, ((0, n_pad - N), (0, 0)))

    grid = (n_pad // tile_n,)

    out2 = pl.pallas_call(
        residual_add_dec2_kernel,
        out_shape=jax.ShapeDtypeStruct((n_pad, D), x.dtype),
        grid_spec=pltpu.PrefetchScalarGridSpec(
            num_scalar_prefetch=0,
            grid=grid,
            in_specs=[
                pl.BlockSpec((tile_n, D), lambda i: (i, 0)),   # x rows (pipelined)
                pl.BlockSpec((D, D), lambda i: (0, 0)),        # centered+folded weight (resident)
                pl.BlockSpec((D, D), lambda i: (0, 0)),        # 1/D broadcaster (resident)
                pl.BlockSpec((1, D), lambda i: (0, 0)),        # folded bias (resident)
            ],
            out_specs=pl.BlockSpec((tile_n, D), lambda i: (i, 0)),
        ),
        compiler_params=pltpu.CompilerParams(
            dimension_semantics=("parallel",),  # independent row tiles -> megacore-shardable
        ),
    )(x2, w_c, ones_dd, b_f)

    return out2[:N].reshape(B, S, D), y


def reference(x, y, w, b, gamma, beta):
    res = x
    mean = jnp.mean(x, axis=-1, keepdims=True)
    var = jnp.mean((x - mean) ** 2, axis=-1, keepdims=True)
    xn = (x - mean) / jnp.sqrt(var + EPS)
    xn = xn * gamma.reshape(1, 1, D) + beta.reshape(1, 1, D)
    out = jnp.einsum("bsd,de->bse", xn, w,
                     precision=jax.lax.Precision.HIGHEST) + b.reshape(1, 1, D)
    return out + res, y


if __name__ == "__main__":
    B, S = 2, 8
    key = jax.random.PRNGKey(0)
    kx, ky, kw, kb, kg, kbt = jax.random.split(key, 6)

    x = jax.random.normal(kx, (B, S, D), dtype=jnp.float32)
    y = jax.random.normal(ky, (B, S, D), dtype=jnp.float32)

    # Deterministic parameter init (W is (in, out)).
    w = jax.random.normal(kw, (D, D), dtype=jnp.float32) * 0.05             # Linear weight
    b = jax.random.normal(kb, (1, D), dtype=jnp.float32) * 0.01             # Linear bias
    gamma = 1.0 + 0.1 * jax.random.normal(kg, (1, D), dtype=jnp.float32)    # LayerNorm weight
    beta = 0.05 * jax.random.normal(kbt, (1, D), dtype=jnp.float32)         # LayerNorm bias

    out, y_out = residual_add_dec2(x, y, w, b, gamma, beta)
    out = jax.block_until_ready(out)

    ref_out, _ = reference(x, y, w, b, gamma, beta)
    assert jnp.allclose(out, ref_out, atol=1e-4, rtol=1e-4), "mismatch vs reference"
    assert jnp.array_equal(y_out, y), "y must pass through unchanged"

    print("KERNEL_OK")
</pallas_src>

<mosaic_0001>
module attributes {stable_mosaic.version = 11 : i64} {
  func.func @residual_add_dec2_kernel(%arg0: i32, %arg1: memref<8x40xf32, #tpu.memory_space<vmem>>, %arg2: memref<40x40xf32, #tpu.memory_space<vmem>>, %arg3: memref<40x40xf32, #tpu.memory_space<vmem>>, %arg4: memref<1x40xf32, #tpu.memory_space<vmem>>, %arg5: memref<8x40xf32, #tpu.memory_space<vmem>>) attributes {dimension_semantics = [#tpu.dimension_semantics<parallel>], iteration_bounds = array<i64: 2>, scalar_prefetch = 0 : i64, scratch_operands = 0 : i64, tpu.core_type = #tpu.core_type<tc>, window_params = [{transform_indices = @transform_0, window_bounds = array<i64: 8, 40>}, {pipeline_mode = #tpu.pipeline_mode<synchronous>, transform_indices = @transform_1, window_bounds = array<i64: 40, 40>}, {pipeline_mode = #tpu.pipeline_mode<synchronous>, transform_indices = @transform_2, window_bounds = array<i64: 40, 40>}, {pipeline_mode = #tpu.pipeline_mode<synchronous>, transform_indices = @transform_3, window_bounds = array<i64: 1, 40>}, {transform_indices = @transform_4, window_bounds = array<i64: 8, 40>}]} {
    %c0 = arith.constant 0 : index
    %c0_0 = arith.constant 0 : index
    %0 = vector.load %arg1[%c0, %c0_0] : memref<8x40xf32, #tpu.memory_space<vmem>>, vector<8x40xf32>
    %c0_1 = arith.constant 0 : index
    %c0_2 = arith.constant 0 : index
    %1 = vector.load %arg2[%c0_1, %c0_2] : memref<40x40xf32, #tpu.memory_space<vmem>>, vector<40x40xf32>
    %cst = arith.constant dense<0.000000e+00> : vector<8x40xf32>
    %2 = tpu.matmul %0, %1, %cst {dimension_numbers = #tpu.dot_dimension_numbers<[1], [0], [0], [1], [0, 0, 1, 1], [], []>, precision = #tpu.contract_precision<fp32>} : vector<8x40xf32>, vector<40x40xf32>, vector<8x40xf32> -> vector<8x40xf32>
    %c0_3 = arith.constant 0 : index
    %c0_4 = arith.constant 0 : index
    %3 = vector.load %arg3[%c0_3, %c0_4] : memref<40x40xf32, #tpu.memory_space<vmem>>, vector<40x40xf32>
    %cst_5 = arith.constant dense<0.000000e+00> : vector<8x40xf32>
    %4 = tpu.matmul %0, %3, %cst_5 {dimension_numbers = #tpu.dot_dimension_numbers<[1], [0], [0], [1], [0, 0, 1, 1], [], []>, precision = #tpu.contract_precision<fp32>} : vector<8x40xf32>, vector<40x40xf32>, vector<8x40xf32> -> vector<8x40xf32>
    %5 = arith.mulf %0, %0 : vector<8x40xf32>
    %c0_6 = arith.constant 0 : index
    %c0_7 = arith.constant 0 : index
    %6 = vector.load %arg3[%c0_6, %c0_7] : memref<40x40xf32, #tpu.memory_space<vmem>>, vector<40x40xf32>
    %cst_8 = arith.constant dense<0.000000e+00> : vector<8x40xf32>
    %7 = tpu.matmul %5, %6, %cst_8 {dimension_numbers = #tpu.dot_dimension_numbers<[1], [0], [0], [1], [0, 0, 1, 1], [], []>, precision = #tpu.contract_precision<fp32>} : vector<8x40xf32>, vector<40x40xf32>, vector<8x40xf32> -> vector<8x40xf32>
    %8 = arith.mulf %4, %4 : vector<8x40xf32>
    %9 = arith.subf %7, %8 : vector<8x40xf32>
    %cst_9 = arith.constant 9.99999974E-6 : f32
    %10 = vector.broadcast %cst_9 : f32 to vector<8x40xf32>
    %11 = arith.addf %9, %10 : vector<8x40xf32>
    %12 = math.rsqrt %11 : vector<8x40xf32>
    %13 = arith.mulf %12, %2 : vector<8x40xf32>
    %c0_10 = arith.constant 0 : index
    %c0_11 = arith.constant 0 : index
    %14 = vector.load %arg4[%c0_10, %c0_11] : memref<1x40xf32, #tpu.memory_space<vmem>>, vector<1x40xf32>
    %15 = vector.broadcast %14 : vector<1x40xf32> to vector<8x40xf32>
    %16 = arith.addf %13, %15 : vector<8x40xf32>
    %17 = arith.addf %16, %0 : vector<8x40xf32>
    %c0_12 = arith.constant 0 : index
    %c0_13 = arith.constant 0 : index
    %18 = vector.load %arg5[%c0_12, %c0_13] : memref<8x40xf32, #tpu.memory_space<vmem>>, vector<8x40xf32>
    tpu.vector_store %arg5[%c0_12, %c0_13], %17 {strides = array<i32>} : memref<8x40xf32, #tpu.memory_space<vmem>>, vector<8x40xf32>,
    return
  }
  func.func @transform_0(%arg0: i32) -> (i32, i32) {
    %c0_i32 = arith.constant 0 : i32
    %c0_i32_0 = arith.constant 0 : i32
    return %arg0, %c0_i32 : i32, i32
  }
  func.func @transform_1(%arg0: i32) -> (i32, i32) {
    %c0_i32 = arith.constant 0 : i32
    %c0_i32_0 = arith.constant 0 : i32
    %c0_i32_1 = arith.constant 0 : i32
    return %c0_i32, %c0_i32_0 : i32, i32
  }
  func.func @transform_2(%arg0: i32) -> (i32, i32) {
    %c0_i32 = arith.constant 0 : i32
    %c0_i32_0 = arith.constant 0 : i32
    %c0_i32_1 = arith.constant 0 : i32
    return %c0_i32, %c0_i32_0 : i32, i32
  }
  func.func @transform_3(%arg0: i32) -> (i32, i32) {
    %c0_i32 = arith.constant 0 : i32
    %c0_i32_0 = arith.constant 0 : i32
    %c0_i32_1 = arith.constant 0 : i32
    return %c0_i32, %c0_i32_0 : i32, i32
  }
  func.func @transform_4(%arg0: i32) -> (i32, i32) {
    %c0_i32 = arith.constant 0 : i32
    %c0_i32_0 = arith.constant 0 : i32
    return %arg0, %c0_i32 : i32, i32
  }
}

</mosaic_0001>

<llo_original>
// kernel: tpu_custom_call.1
$region0: #{tpu_custom_call.1}
  #allocation0 [shape = 'u32[]', space=smem, size = 0x4, offset = 0x4, fixed_abs, tag = 'smem constant byte address 0x4 - core index']
  #allocation1 [shape = 'u32[144,128]{1,0:T(1,128)}', space=vmem, size = 0x12000, scoped, tag = 'internal scratch']
  %s0 = inlined_call_operand.hbm [shape: f32[16,40], index: 0, kind: input, shape index: {}]
  %s1 = inlined_call_operand.hbm [shape: f32[40,40], index: 1, kind: input, shape index: {}]
  %s2 = inlined_call_operand.hbm [shape: f32[40,40], index: 2, kind: input, shape index: {}]
  %s3 = inlined_call_operand.vmem [shape: f32[1,40], index: 3, kind: input, shape index: {}]
  %s4 = inlined_call_operand.hbm [shape: f32[16,40], index: 4, kind: output, shape index: {}]
  %s5 = sld [smem:[#allocation0]]
  $region61: #{tpu_custom_call.1} parent=0
    _
  %s7 = ssub.s32 1, %s5
  %s8 = scalar_select 0, %s7, %s5
  $region1: #{tpu_custom_call.1} parent=0
    #allocation2 [shape = 'u8[8192]{0}', space=vmem, size = 0x2000, scoped, tag = 'input window, operand 0']
    #allocation3 [shape = 's32[2]{0}', space=sflag, size = 0x8, scoped, tag = 'scoped memory for tpu_custom_call.1']
    #allocation4 [shape = 's32[2]{0}', space=sflag, size = 0x8, scoped, tag = 'scoped memory for tpu_custom_call.1']
    #allocation5 [shape = 'u8[20480]{0}', space=vmem, size = 0x5000, scoped, tag = 'input window, operand 1, single buffered']
    #allocation6 [shape = 's32[1]{0}', space=sflag, size = 0x4, scoped, tag = 'scoped memory for tpu_custom_call.1']
    #allocation7 [shape = 'u8[20480]{0}', space=vmem, size = 0x5000, scoped, tag = 'input window, operand 2, single buffered']
    #allocation8 [shape = 'u8[8192]{0}', space=vmem, size = 0x2000, scoped, tag = 'output window, operand 0']
    %9 = vsyncpa [#allocation3], 0
    %s10 = scalar_lea.sflag [#allocation3], 1
    %11 = vsyncpa %s10, 0
    %12 = vsyncpa [#allocation6], 0
    %13 = vsyncpa [#allocation4], 0
    %s14 = scalar_lea.sflag [#allocation4], 1
    %15 = vsyncpa %s14, 0
    loop: start=0, step=1, limit=4
    $region2: #{tpu_custom_call.1} parent=1 // loop_pre_header
      _
    $region3: #{tpu_custom_call.1} parent=1 // loop_header
      %s17 = sphi 0, %s21
      %p18 = scmp.ge.s32.totalorder %s17, 4
      %s27 = sphi 0, %s29
      %s30 = sphi 0, %s27
      %s31 = sphi 0, %s30
      %s47 = sphi 0, %s31
      %s51 = sphi 0, %s51
      %s53 = sphi 0, %s51
      %s54 = sphi 0, %s53
      %s68 = sphi 0, %s54
      %s72 = sphi 0, %s72
      %s74 = sphi 0, %s72
      %s75 = sphi 0, %s74
      %s89 = sphi 0, %s75
      %s93 = sphi 0, %s93
      %s95 = sphi 0, %s93
      %s96 = sphi 0, %s95
      %s110 = sphi 0, %s96
      %s116 = sphi 0, %s118
      %s119 = sphi 0, %s116
      %s120 = sphi 0, %s119
      %s136 = sphi 0, %s120
    $region4: #{tpu_custom_call.1} parent=1 // loop_header_branch
      %20 = sbr.rel (%p18) target = $region8
    $region5: #{tpu_custom_call.1} parent=1 // loop_body
      %s22 = ssub.s32 %s17, 1
      %s23 = ssub.s32 %s17, 2
      %s24 = sadd.s32 %s17, 1
      %s25 = ssub.s32 %s17, %s24
      %p26 = scmp.eq.s32.totalorder %s25, 0
      %s28 = sadd.s32 %s27, 1
      %s29 = scalar_select %p26, %s27, %s28
      %p32 = pneg %p26
      %p33 = scmp.eq.s32.totalorder %s17, 1
      %p34 = por %p32, %p33
      %p35 = scmp.ne.s32.totalorder %s27, %s30
      %p36 = scmp.eq.s32.totalorder %s17, 0
      %p37 = por %p35, %p36
      %p38 = scmp.ne.s32.totalorder %s27, %s30
      %p39 = scmp.eq.s32.totalorder %s22, 1
      %p40 = por %p38, %p39
      %p41 = scmp.ne.s32.totalorder %s30, %s31
      %p42 = scmp.eq.s32.totalorder %s22, 0
      %p43 = por %p41, %p42
      %p44 = scmp.ne.s32.totalorder %s30, %s31
      %p45 = scmp.eq.s32.totalorder %s23, 1
      %p46 = por %p44, %p45
      %p48 = scmp.ne.s32.totalorder %s31, %s47
      %p49 = scmp.eq.s32.totalorder %s23, 0
      %p50 = por %p48, %p49
      %s52 = sadd.s32 %s51, 1
      %p55 = scmp.eq.s32.totalorder %s17, 1
      %p56 = scmp.ne.s32.totalorder %s51, %s53
      %p57 = scmp.eq.s32.totalorder %s17, 0
      %p58 = por %p56, %p57
      %p59 = scmp.ne.s32.totalorder %s51, %s53
      %p60 = scmp.eq.s32.totalorder %s22, 1
      %p61 = por %p59, %p60
      %p62 = scmp.ne.s32.totalorder %s53, %s54
      %p63 = scmp.eq.s32.totalorder %s22, 0
      %p64 = por %p62, %p63
      %p65 = scmp.ne.s32.totalorder %s53, %s54
      %p66 = scmp.eq.s32.totalorder %s23, 1
      %p67 = por %p65, %p66
      %p69 = scmp.ne.s32.totalorder %s54, %s68
      %p70 = scmp.eq.s32.totalorder %s23, 0
      %p71 = por %p69, %p70
      %s73 = sadd.s32 %s72, 1
      %p76 = scmp.eq.s32.totalorder %s17, 1
      %p77 = scmp.ne.s32.totalorder %s72, %s74
      %p78 = scmp.eq.s32.totalorder %s17, 0
      %p79 = por %p77, %p78
      %p80 = scmp.ne.s32.totalorder %s72, %s74
      %p81 = scmp.eq.s32.totalorder %s22, 1
      %p82 = por %p80, %p81
      %p83 = scmp.ne.s32.totalorder %s74, %s75
      %p84 = scmp.eq.s32.totalorder %s22, 0
      %p85 = por %p83, %p84
      %p86 = scmp.ne.s32.totalorder %s74, %s75
      %p87 = scmp.eq.s32.totalorder %s23, 1
      %p88 = por %p86, %p87
      %p90 = scmp.ne.s32.totalorder %s75, %s89
      %p91 = scmp.eq.s32.totalorder %s23, 0
      %p92 = por %p90, %p91
      %s94 = sadd.s32 %s93, 1
      %p97 = scmp.eq.s32.totalorder %s17, 1
      %p98 = scmp.ne.s32.totalorder %s93, %s95
      %p99 = scmp.eq.s32.totalorder %s17, 0
      %p100 = por %p98, %p99
      %p101 = scmp.ne.s32.totalorder %s93, %s95
      %p102 = scmp.eq.s32.totalorder %s22, 1
      %p103 = por %p101, %p102
      %p104 = scmp.ne.s32.totalorder %s95, %s96
      %p105 = scmp.eq.s32.totalorder %s22, 0
      %p106 = por %p104, %p105
      %p107 = scmp.ne.s32.totalorder %s95, %s96
      %p108 = scmp.eq.s32.totalorder %s23, 1
      %p109 = por %p107, %p108
      %p111 = scmp.ne.s32.totalorder %s96, %s110
      %p112 = scmp.eq.s32.totalorder %s23, 0
      %p113 = por %p111, %p112
      %s114 = ssub.s32 %s17, %s24
      %p115 = scmp.eq.s32.totalorder %s114, 0
      %s117 = sadd.s32 %s116, 1
      %s118 = scalar_select %p115, %s116, %s117
      %p121 = pneg %p115
      %p122 = scmp.eq.s32.totalorder %s17, 1
      %p123 = por %p121, %p122
      %p124 = scmp.ne.s32.totalorder %s116, %s119
      %p125 = scmp.eq.s32.totalorder %s17, 0
      %p126 = por %p124, %p125
      %p127 = scmp.ne.s32.totalorder %s116, %s119
      %p128 = scmp.eq.s32.totalorder %s22, 1
      %p129 = por %p127, %p128
      %p130 = scmp.ne.s32.totalorder %s119, %s120
      %p131 = scmp.eq.s32.totalorder %s22, 0
      %p132 = por %p130, %p131
      %p133 = scmp.ne.s32.totalorder %s119, %s120
      %p134 = scmp.eq.s32.totalorder %s23, 1
      %p135 = por %p133, %p134
      %p137 = scmp.ne.s32.totalorder %s120, %s136
      %p138 = scmp.eq.s32.totalorder %s23, 0
      %p139 = por %p137, %p138
      %p140 = scmp.le.s32.totalorder 1, %s17
      %p141 = scmp.lt.s32.totalorder %s17, 3
      %p142 = pnand %p140, %p141
      %p143 = pneg %p142
      // Predicated region
      $region9: #{tpu_custom_call.1} parent=5 // pred_check
        _
      $region10: #{tpu_custom_call.1} parent=5 // pred_check_branch
        %145 = sbr.rel (%p142) target = $region12
      $region11: #{tpu_custom_call.1} parent=5 // pred_region
        %s146 = ssub.s32 %s17, 1
        // Predicated region
        $region13: #{tpu_custom_call.1} parent=11 // pred_check
          %p147 = pneg %p64
        $region14: #{tpu_custom_call.1} parent=11 // pred_check_branch
          %149 = sbr.rel (%p147) target = $region16
        $region15: #{tpu_custom_call.1} parent=11 // pred_region
          %s151 = ssub.s32 640, 640
          %152 = vsyncadd [#allocation6], %s151
          %s153 = sshll.u32 [#allocation5], 4
          %s154 = int_to_ptr.vmem [resolvable:$true] %s153
          %159 = dma.hbm_to_vmem [thread:$0]  %s1, 640, %s154, [#allocation6], 128, 128, 8
        $region16: #{tpu_custom_call.1} parent=11 // pred_fallthru
          _
        // Predicated region
        $region17: #{tpu_custom_call.1} parent=11 // pred_check
          %p160 = pneg %p85
        $region18: #{tpu_custom_call.1} parent=11 // pred_check_branch
          %162 = sbr.rel (%p160) target = $region20
        $region19: #{tpu_custom_call.1} parent=11 // pred_region
          %s164 = ssub.s32 640, 640
          %165 = vsyncadd [#allocation6], %s164
          %s166 = sshll.u32 [#allocation7], 4
          %s167 = int_to_ptr.vmem [resolvable:$true] %s166
          %172 = dma.hbm_to_vmem [thread:$0]  %s2, 640, %s167, [#allocation6], 128, 128, 8
        $region20: #{tpu_custom_call.1} parent=11 // pred_fallthru
          _
        // Predicated region
        $region21: #{tpu_custom_call.1} parent=11 // pred_check
          %p173 = pneg %p106
        $region22: #{tpu_custom_call.1} parent=11 // pred_check_branch
          %175 = sbr.rel (%p173) target = $region24
        $region23: #{tpu_custom_call.1} parent=11 // pred_region
          _
        $region24: #{tpu_custom_call.1} parent=11 // pred_fallthru
          _
      $region12: #{tpu_custom_call.1} parent=5 // pred_fallthru
        _
      %p176 = scmp.lt.s32.totalorder %s17, 2
      // Predicated region
      $region25: #{tpu_custom_call.1} parent=5 // pred_check
        %p177 = pneg %p176
      $region26: #{tpu_custom_call.1} parent=5 // pred_check_branch
        %179 = sbr.rel (%p177) target = $region28
      $region27: #{tpu_custom_call.1} parent=5 // pred_region
        // Predicated region
        $region29: #{tpu_custom_call.1} parent=27 // pred_check
          %p180 = pneg %p37
        $region30: #{tpu_custom_call.1} parent=27 // pred_check_branch
          %182 = sbr.rel (%p180) target = $region32
        $region31: #{tpu_custom_call.1} parent=27 // pred_region
          %s183 = sand.u32 %s27, 1
          %s184 = scalar_lea.sflag [#allocation3], %s183
          %s185 = sand.u32 %s27, 1
          %s186 = smul.addr %s185, 8
          %s187 = scalar_lea.vmem [#allocation2], %s186
          %s189 = ssub.s32 128, 128
          %190 = vsyncadd %s184, %s189
          %s191 = smul.addr %s17, 128
          %s192 = scalar_lea.hbm %s0, %s191
          %s194 = sshll.u32 %s187, 4
          %s195 = int_to_ptr.vmem [resolvable:$true] %s194
          %197 = dma.hbm_to_vmem [thread:$0]  %s192, 128, %s195, %s184
        $region32: #{tpu_custom_call.1} parent=27 // pred_fallthru
          _
      $region28: #{tpu_custom_call.1} parent=5 // pred_fallthru
        _
      %p198 = scmp.le.s32.totalorder 1, %s17
      %p199 = scmp.lt.s32.totalorder %s17, 3
      %p200 = pnand %p198, %p199
      %p201 = pneg %p200
      // Predicated region
      $region33: #{tpu_custom_call.1} parent=5 // pred_check
        _
      $region34: #{tpu_custom_call.1} parent=5 // pred_check_branch
        %203 = sbr.rel (%p200) target = $region36
      $region35: #{tpu_custom_call.1} parent=5 // pred_region
        %s204 = ssub.s32 %s17, 1
        %s205 = sand.u32 %s30, 1
        %s206 = scalar_lea.sflag [#allocation3], %s205
        %s207 = sand.u32 %s30, 1
        %s208 = smul.addr %s207, 8
        %s209 = scalar_lea.vmem [#allocation2], %s208
        // Predicated region
        $region37: #{tpu_custom_call.1} parent=35 // pred_check
          %p210 = pneg %p43
        $region38: #{tpu_custom_call.1} parent=35 // pred_check_branch
          %212 = sbr.rel (%p210) target = $region40
        $region39: #{tpu_custom_call.1} parent=35 // pred_region
          %213 = dma.done %s206, 128
        $region40: #{tpu_custom_call.1} parent=35 // pred_fallthru
          _
        // Predicated region
        $region41: #{tpu_custom_call.1} parent=35 // pred_check
          %p214 = pneg %p64
        $region42: #{tpu_custom_call.1} parent=35 // pred_check_branch
          %216 = sbr.rel (%p214) target = $region44
        $region43: #{tpu_custom_call.1} parent=35 // pred_region
          %217 = dma.done [#allocation6], 640
        $region44: #{tpu_custom_call.1} parent=35 // pred_fallthru
          _
        // Predicated region
        $region45: #{tpu_custom_call.1} parent=35 // pred_check
          %p218 = pneg %p85
        $region46: #{tpu_custom_call.1} parent=35 // pred_check_branch
          %220 = sbr.rel (%p218) target = $region48
        $region47: #{tpu_custom_call.1} parent=35 // pred_region
          %221 = dma.done [#allocation6], 640
        $region48: #{tpu_custom_call.1} parent=35 // pred_fallthru
          _
        %s222 = sand.u32 %s30, 1
        %s223 = scalar_lea.sflag [#allocation3], %s222
        %s224 = sand.u32 %s30, 1
        %s225 = smul.addr %s224, 8
        %s226 = scalar_lea.vmem [#allocation2], %s225
        %p227 = pneg %p43
        %p228 = pneg %p40
        %p229 = pneg %p64
        %p230 = pneg %p61
        %p231 = pneg %p85
        %p232 = pneg %p82
        %p233 = pneg %p106
        %p234 = pneg %p103
        %p235 = pneg %p132
        %p236 = pneg %p129
        %s237 = sand.u32 %s119, 1
        %s238 = scalar_lea.sflag [#allocation4], %s237
        %s239 = sand.u32 %s119, 1
        %s240 = smul.addr %s239, 8
        %s241 = scalar_lea.vmem [#allocation8], %s240
        %v242 = vld [vmem:[%s209] sm:$0xff]
        %v243 = vld [vmem:[#allocation5] sm:$0xff]
        %v244 = vld [vmem:[#allocation5 + $0x8] sm:$0xff]
        %v245 = vld [vmem:[#allocation5 + $0x10] sm:$0xff]
        %v246 = vld [vmem:[#allocation5 + $0x18] sm:$0xff]
        %v247 = vld [vmem:[#allocation5 + $0x20] sm:$0xff]
        %vm248 = vcmask 326656
        %v250 = vsel %vm248, %v242, 0
        %252 = vmatprep.subr.mxu0 0.0
        %253 = vmatpush1.msra.mxu0 0.0
        %254 = vmatprep.subr.mxu0 0.0
        %255 = vmatpush1.msra.mxu0 0.0
        %256 = vmatprep.subr.mxu0 0.0
        %257 = vmatpush1.msra.mxu0 0.0
        %258 = vmatprep.subr.mxu0 0.0
        %259 = vmatpush1.msra.mxu0 0.0
        %260 = vmatprep.subr.mxu0 0.0
        %261 = vmatpush1.msra.mxu0 0.0
        %262 = vmatprep.subr.mxu0 0.0
        %263 = vmatpush1.msra.mxu0 0.0
        %264 = vmatprep.subr.mxu0 0.0
        %265 = vmatpush1.msra.mxu0 0.0
        %266 = vmatprep.subr.mxu0 0.0
        %267 = vmatpush1.msra.mxu0 0.0
        %268 = vmatprep.subr.mxu0 0.0
        %269 = vmatpush1.msra.mxu0 0.0
        %270 = vmatprep.subr.mxu0 0.0
        %271 = vmatpush1.msra.mxu0 0.0
        %272 = vmatprep.subr.mxu0 0.0
        %273 = vmatpush1.msra.mxu0 0.0
        %274 = vmatprep.subr.mxu0 0.0
        %v275 = vand.u32 %v247, 4294901760
        %276 = vmatpush1.msra.mxu0 %v275
        %277 = vmatprep.subr.mxu0 0.0
        %v278 = vand.u32 %v246, 4294901760
        %279 = vmatpush1.msra.mxu0 %v278
        %280 = vmatprep.subr.mxu0 0.0
        %v281 = vand.u32 %v245, 4294901760
        %282 = vmatpush1.msra.mxu0 %v281
        %283 = vmatprep.subr.mxu0 0.0
        %v284 = vand.u32 %v244, 4294901760
        %285 = vmatpush1.msra.mxu0 %v284
        %286 = vmatprep.subr.mxu0 0.0
        %v287 = vand.u32 %v243, 4294901760
        %288 = vmatpush1.msra.mxu0 %v287
        %289 = vmatprep.subr.mxu0 0.0
        %290 = vmatpush2.msra.mxu0 0.0
        %291 = vmatprep.subr.mxu0 0.0
        %292 = vmatpush2.msra.mxu0 0.0
        %293 = vmatprep.subr.mxu0 0.0
        %294 = vmatpush2.msra.mxu0 0.0
        %295 = vmatprep.subr.mxu0 0.0
        %296 = vmatpush2.msra.mxu0 0.0
        %297 = vmatprep.subr.mxu0 0.0
        %298 = vmatpush2.msra.mxu0 0.0
        %299 = vmatprep.subr.mxu0 0.0
        %300 = vmatpush2.msra.mxu0 0.0
        %301 = vmatprep.subr.mxu0 0.0
        %302 = vmatpush2.msra.mxu0 0.0
        %303 = vmatprep.subr.mxu0 0.0
        %304 = vmatpush2.msra.mxu0 0.0
        %305 = vmatprep.subr.mxu0 0.0
        %306 = vmatpush2.msra.mxu0 0.0
        %307 = vmatprep.subr.mxu0 0.0
        %308 = vmatpush2.msra.mxu0 0.0
        %309 = vmatprep.subr.mxu0 0.0
        %310 = vmatpush2.msra.mxu0 0.0
        %311 = vmatprep.subr.mxu0 0.0
        %312 = vmatpush2.msra.mxu0 0.0
        %313 = vmatprep.subr.mxu0 0.0
        %314 = vmatpush2.msra.mxu0 0.0
        %315 = vmatprep.subr.mxu0 0.0
        %316 = vmatpush2.msra.mxu0 0.0
        %317 = vmatprep.subr.mxu0 0.0
        %318 = vmatpush2.msra.mxu0 0.0
        %319 = vmatprep.subr.mxu0 0.0
        %320 = vmatpush2.msra.mxu0 0.0
        %321 = vmatprep.mubr.f32.mxu0 0.0
        %v322 = vand.u32 %v250, 4294901760
        %v323 = vsub.f32 %v250, %v322
        %v324 = vand.u32 %v323, 4294901760
        %v325 = vsub.f32 %v323, %v324
        %v326 = vand.u32 %v325, 4294901760
        %327 = vmatmul.mubr.f32.gmra.mxu0 %v326
        %v328 = vpop.f32.mrf.mxu0
        %v329 = vadd.f32 0.0, %v328
        %v330 = vpop.f32.mrf.mxu0
        %331 = vdwg.mxu0
        %332 = vmatprep.subr.mxu0 0.0
        %333 = vmatpush1.msra.mxu0 0.0
        %334 = vmatprep.subr.mxu0 0.0
        %335 = vmatpush1.msra.mxu0 0.0
        %336 = vmatprep.subr.mxu0 0.0
        %337 = vmatpush1.msra.mxu0 0.0
        %338 = vmatprep.subr.mxu0 0.0
        %339 = vmatpush1.msra.mxu0 0.0
        %340 = vmatprep.subr.mxu0 0.0
        %341 = vmatpush1.msra.mxu0 0.0
        %342 = vmatprep.subr.mxu0 0.0
        %343 = vmatpush1.msra.mxu0 0.0
        %344 = vmatprep.subr.mxu0 0.0
        %345 = vmatpush1.msra.mxu0 0.0
        %346 = vmatprep.subr.mxu0 0.0
        %347 = vmatpush1.msra.mxu0 0.0
        %348 = vmatprep.subr.mxu0 0.0
        %349 = vmatpush1.msra.mxu0 0.0
        %350 = vmatprep.subr.mxu0 0.0
        %351 = vmatpush1.msra.mxu0 0.0
        %352 = vmatprep.subr.mxu0 0.0
        %353 = vmatpush1.msra.mxu0 0.0
        %354 = vmatprep.subr.mxu0 0.0
        %v355 = vand.u32 %v247, 4294901760
        %v356 = vsub.f32 %v247, %v355
        %v357 = vand.u32 %v356, 4294901760
        %v358 = vsub.f32 %v356, %v357
        %v359 = vand.u32 %v358, 4294901760
        %360 = vmatpush1.msra.mxu0 %v359
        %361 = vmatprep.subr.mxu0 0.0
        %v362 = vand.u32 %v246, 4294901760
        %v363 = vsub.f32 %v246, %v362
        %v364 = vand.u32 %v363, 4294901760
        %v365 = vsub.f32 %v363, %v364
        %v366 = vand.u32 %v365, 4294901760
        %367 = vmatpush1.msra.mxu0 %v366
        %368 = vmatprep.subr.mxu0 0.0
        %v369 = vand.u32 %v245, 4294901760
        %v370 = vsub.f32 %v245, %v369
        %v371 = vand.u32 %v370, 4294901760
        %v372 = vsub.f32 %v370, %v371
        %v373 = vand.u32 %v372, 4294901760
        %374 = vmatpush1.msra.mxu0 %v373
        %375 = vmatprep.subr.mxu0 0.0
        %v376 = vand.u32 %v244, 4294901760
        %v377 = vsub.f32 %v244, %v376
        %v378 = vand.u32 %v377, 4294901760
        %v379 = vsub.f32 %v377, %v378
        %v380 = vand.u32 %v379, 4294901760
        %381 = vmatpush1.msra.mxu0 %v380
        %382 = vmatprep.subr.mxu0 0.0
        %v383 = vand.u32 %v243, 4294901760
        %v384 = vsub.f32 %v243, %v383
        %v385 = vand.u32 %v384, 4294901760
        %v386 = vsub.f32 %v384, %v385
        %v387 = vand.u32 %v386, 4294901760
        %388 = vmatpush1.msra.mxu0 %v387
        %389 = vmatprep.subr.mxu0 0.0
        %390 = vmatpush2.msra.mxu0 0.0
        %391 = vmatprep.subr.mxu0 0.0
        %392 = vmatpush2.msra.mxu0 0.0
        %393 = vmatprep.subr.mxu0 0.0
        %394 = vmatpush2.msra.mxu0 0.0
        %395 = vmatprep.subr.mxu0 0.0
        %396 = vmatpush2.msra.mxu0 0.0
        %397 = vmatprep.subr.mxu0 0.0
        %398 = vmatpush2.msra.mxu0 0.0
        %399 = vmatprep.subr.mxu0 0.0
        %400 = vmatpush2.msra.mxu0 0.0
        %401 = vmatprep.subr.mxu0 0.0
        %402 = vmatpush2.msra.mxu0 0.0
        %403 = vmatprep.subr.mxu0 0.0
        %404 = vmatpush2.msra.mxu0 0.0
        %405 = vmatprep.subr.mxu0 0.0
        %406 = vmatpush2.msra.mxu0 0.0
        %407 = vmatprep.subr.mxu0 0.0
        %408 = vmatpush2.msra.mxu0 0.0
        %409 = vmatprep.subr.mxu0 0.0
        %410 = vmatpush2.msra.mxu0 0.0
        %411 = vmatprep.subr.mxu0 0.0
        %412 = vmatpush2.msra.mxu0 0.0
        %413 = vmatprep.subr.mxu0 0.0
        %414 = vmatpush2.msra.mxu0 0.0
        %415 = vmatprep.subr.mxu0 0.0
        %416 = vmatpush2.msra.mxu0 0.0
        %417 = vmatprep.subr.mxu0 0.0
        %418 = vmatpush2.msra.mxu0 0.0
        %419 = vmatprep.subr.mxu0 0.0
        %420 = vmatpush2.msra.mxu0 0.0
        %421 = vmatprep.mubr.f32.mxu0 0.0
        %v422 = vand.u32 %v250, 4294901760
        %423 = vmatmul.mubr.f32.gmra.mxu0 %v422
        %v424 = vpop.f32.mrf.mxu0
        %v425 = vadd.f32 %v329, %v424
        %v426 = vpop.f32.mrf.mxu0
        %427 = vdwg.mxu0
        %428 = vmatprep.subr.mxu0 0.0
        %429 = vmatpush1.msra.mxu0 0.0
        %430 = vmatprep.subr.mxu0 0.0
        %431 = vmatpush1.msra.mxu0 0.0
        %432 = vmatprep.subr.mxu0 0.0
        %433 = vmatpush1.msra.mxu0 0.0
        %434 = vmatprep.subr.mxu0 0.0
        %435 = vmatpush1.msra.mxu0 0.0
        %436 = vmatprep.subr.mxu0 0.0
        %437 = vmatpush1.msra.mxu0 0.0
        %438 = vmatprep.subr.mxu0 0.0
        %439 = vmatpush1.msra.mxu0 0.0
        %440 = vmatprep.subr.mxu0 0.0
        %441 = vmatpush1.msra.mxu0 0.0
        %442 = vmatprep.subr.mxu0 0.0
        %443 = vmatpush1.msra.mxu0 0.0
        %444 = vmatprep.subr.mxu0 0.0
        %445 = vmatpush1.msra.mxu0 0.0
        %446 = vmatprep.subr.mxu0 0.0
        %447 = vmatpush1.msra.mxu0 0.0
        %448 = vmatprep.subr.mxu0 0.0
        %449 = vmatpush1.msra.mxu0 0.0
        %450 = vmatprep.subr.mxu0 0.0
        %v451 = vand.u32 %v247, 4294901760
        %v452 = vsub.f32 %v247, %v451
        %453 = vmatpush1.msra.mxu0 %v452
        %454 = vmatprep.subr.mxu0 0.0
        %v455 = vand.u32 %v246, 4294901760
        %v456 = vsub.f32 %v246, %v455
        %457 = vmatpush1.msra.mxu0 %v456
        %458 = vmatprep.subr.mxu0 0.0
        %v459 = vand.u32 %v245, 4294901760
        %v460 = vsub.f32 %v245, %v459
        %461 = vmatpush1.msra.mxu0 %v460
        %462 = vmatprep.subr.mxu0 0.0
        %v463 = vand.u32 %v244, 4294901760
        %v464 = vsub.f32 %v244, %v463
        %465 = vmatpush1.msra.mxu0 %v464
        %466 = vmatprep.subr.mxu0 0.0
        %v467 = vand.u32 %v243, 4294901760
        %v468 = vsub.f32 %v243, %v467
        %469 = vmatpush1.msra.mxu0 %v468
        %470 = vmatprep.subr.mxu0 0.0
        %471 = vmatpush2.msra.mxu0 0.0
        %472 = vmatprep.subr.mxu0 0.0
        %473 = vmatpush2.msra.mxu0 0.0
        %474 = vmatprep.subr.mxu0 0.0
        %475 = vmatpush2.msra.mxu0 0.0
        %476 = vmatprep.subr.mxu0 0.0
        %477 = vmatpush2.msra.mxu0 0.0
        %478 = vmatprep.subr.mxu0 0.0
        %479 = vmatpush2.msra.mxu0 0.0
        %480 = vmatprep.subr.mxu0 0.0
        %481 = vmatpush2.msra.mxu0 0.0
        %482 = vmatprep.subr.mxu0 0.0
        %483 = vmatpush2.msra.mxu0 0.0
        %484 = vmatprep.subr.mxu0 0.0
        %485 = vmatpush2.msra.mxu0 0.0
        %486 = vmatprep.subr.mxu0 0.0
        %487 = vmatpush2.msra.mxu0 0.0
        %488 = vmatprep.subr.mxu0 0.0
        %489 = vmatpush2.msra.mxu0 0.0
        %490 = vmatprep.subr.mxu0 0.0
        %491 = vmatpush2.msra.mxu0 0.0
        %492 = vmatprep.subr.mxu0 0.0
        %493 = vmatpush2.msra.mxu0 0.0
        %494 = vmatprep.subr.mxu0 0.0
        %495 = vmatpush2.msra.mxu0 0.0
        %496 = vmatprep.subr.mxu0 0.0
        %497 = vmatpush2.msra.mxu0 0.0
        %498 = vmatprep.subr.mxu0 0.0
        %499 = vmatpush2.msra.mxu0 0.0
        %500 = vmatprep.subr.mxu0 0.0
        %501 = vmatpush2.msra.mxu0 0.0
        %502 = vmatprep.mubr.f32.mxu0 0.0
        %v503 = vand.u32 %v250, 4294901760
        %v504 = vsub.f32 %v250, %v503
        %505 = vmatmul.mubr.f32.gmra.mxu0 %v504
        %v506 = vpop.f32.mrf.mxu0
        %v507 = vadd.f32 %v425, %v506
        %v508 = vpop.f32.mrf.mxu0
        %509 = vdwg.mxu0
        %510 = vmatprep.subr.mxu0 0.0
        %511 = vmatpush1.msra.mxu0 0.0
        %512 = vmatprep.subr.mxu0 0.0
        %513 = vmatpush1.msra.mxu0 0.0
        %514 = vmatprep.subr.mxu0 0.0
        %515 = vmatpush1.msra.mxu0 0.0
        %516 = vmatprep.subr.mxu0 0.0
        %517 = vmatpush1.msra.mxu0 0.0
        %518 = vmatprep.subr.mxu0 0.0
        %519 = vmatpush1.msra.mxu0 0.0
        %520 = vmatprep.subr.mxu0 0.0
        %521 = vmatpush1.msra.mxu0 0.0
        %522 = vmatprep.subr.mxu0 0.0
        %523 = vmatpush1.msra.mxu0 0.0
        %524 = vmatprep.subr.mxu0 0.0
        %525 = vmatpush1.msra.mxu0 0.0
        %526 = vmatprep.subr.mxu0 0.0
        %527 = vmatpush1.msra.mxu0 0.0
        %528 = vmatprep.subr.mxu0 0.0
        %529 = vmatpush1.msra.mxu0 0.0
        %530 = vmatprep.subr.mxu0 0.0
        %531 = vmatpush1.msra.mxu0 0.0
        %532 = vmatprep.subr.mxu0 0.0
        %v533 = vand.u32 %v247, 4294901760
        %534 = vmatpush1.msra.mxu0 %v533
        %535 = vmatprep.subr.mxu0 0.0
        %v536 = vand.u32 %v246, 4294901760
        %537 = vmatpush1.msra.mxu0 %v536
        %538 = vmatprep.subr.mxu0 0.0
        %v539 = vand.u32 %v245, 4294901760
        %540 = vmatpush1.msra.mxu0 %v539
        %541 = vmatprep.subr.mxu0 0.0
        %v542 = vand.u32 %v244, 4294901760
        %543 = vmatpush1.msra.mxu0 %v542
        %544 = vmatprep.subr.mxu0 0.0
        %v545 = vand.u32 %v243, 4294901760
        %546 = vmatpush1.msra.mxu0 %v545
        %547 = vmatprep.subr.mxu0 0.0
        %548 = vmatpush2.msra.mxu0 0.0
        %549 = vmatprep.subr.mxu0 0.0
        %550 = vmatpush2.msra.mxu0 0.0
        %551 = vmatprep.subr.mxu0 0.0
        %552 = vmatpush2.msra.mxu0 0.0
        %553 = vmatprep.subr.mxu0 0.0
        %554 = vmatpush2.msra.mxu0 0.0
        %555 = vmatprep.subr.mxu0 0.0
        %556 = vmatpush2.msra.mxu0 0.0
        %557 = vmatprep.subr.mxu0 0.0
        %558 = vmatpush2.msra.mxu0 0.0
        %559 = vmatprep.subr.mxu0 0.0
        %560 = vmatpush2.msra.mxu0 0.0
        %561 = vmatprep.subr.mxu0 0.0
        %562 = vmatpush2.msra.mxu0 0.0
        %563 = vmatprep.subr.mxu0 0.0
        %564 = vmatpush2.msra.mxu0 0.0
        %565 = vmatprep.subr.mxu0 0.0
        %566 = vmatpush2.msra.mxu0 0.0
        %567 = vmatprep.subr.mxu0 0.0
        %568 = vmatpush2.msra.mxu0 0.0
        %569 = vmatprep.subr.mxu0 0.0
        %570 = vmatpush2.msra.mxu0 0.0
        %571 = vmatprep.subr.mxu0 0.0
        %572 = vmatpush2.msra.mxu0 0.0
        %573 = vmatprep.subr.mxu0 0.0
        %574 = vmatpush2.msra.mxu0 0.0
        %575 = vmatprep.subr.mxu0 0.0
        %576 = vmatpush2.msra.mxu0 0.0
        %577 = vmatprep.subr.mxu0 0.0
        %578 = vmatpush2.msra.mxu0 0.0
        %579 = vmatprep.mubr.f32.mxu0 0.0
        %v580 = vand.u32 %v250, 4294901760
        %v581 = vsub.f32 %v250, %v580
        %v582 = vand.u32 %v581, 4294901760
        %583 = vmatmul.mubr.f32.gmra.mxu0 %v582
        %v584 = vpop.f32.mrf.mxu0
        %v585 = vadd.f32 %v507, %v584
        %v586 = vpop.f32.mrf.mxu0
        %587 = vdwg.mxu0
        %588 = vmatprep.subr.mxu0 0.0
        %589 = vmatpush1.msra.mxu0 0.0
        %590 = vmatprep.subr.mxu0 0.0
        %591 = vmatpush1.msra.mxu0 0.0
        %592 = vmatprep.subr.mxu0 0.0
        %593 = vmatpush1.msra.mxu0 0.0
        %594 = vmatprep.subr.mxu0 0.0
        %595 = vmatpush1.msra.mxu0 0.0
        %596 = vmatprep.subr.mxu0 0.0
        %597 = vmatpush1.msra.mxu0 0.0
        %598 = vmatprep.subr.mxu0 0.0
        %599 = vmatpush1.msra.mxu0 0.0
        %600 = vmatprep.subr.mxu0 0.0
        %601 = vmatpush1.msra.mxu0 0.0
        %602 = vmatprep.subr.mxu0 0.0
        %603 = vmatpush1.msra.mxu0 0.0
        %604 = vmatprep.subr.mxu0 0.0
        %605 = vmatpush1.msra.mxu0 0.0
        %606 = vmatprep.subr.mxu0 0.0
        %607 = vmatpush1.msra.mxu0 0.0
        %608 = vmatprep.subr.mxu0 0.0
        %609 = vmatpush1.msra.mxu0 0.0
        %610 = vmatprep.subr.mxu0 0.0
        %v611 = vand.u32 %v247, 4294901760
        %v612 = vsub.f32 %v247, %v611
        %v613 = vand.u32 %v612, 4294901760
        %614 = vmatpush1.msra.mxu0 %v613
        %615 = vmatprep.subr.mxu0 0.0
        %v616 = vand.u32 %v246, 4294901760
        %v617 = vsub.f32 %v246, %v616
        %v618 = vand.u32 %v617, 4294901760
        %619 = vmatpush1.msra.mxu0 %v618
        %620 = vmatprep.subr.mxu0 0.0
        %v621 = vand.u32 %v245, 4294901760
        %v622 = vsub.f32 %v245, %v621
        %v623 = vand.u32 %v622, 4294901760
        %624 = vmatpush1.msra.mxu0 %v623
        %625 = vmatprep.subr.mxu0 0.0
        %v626 = vand.u32 %v244, 4294901760
        %v627 = vsub.f32 %v244, %v626
        %v628 = vand.u32 %v627, 4294901760
        %629 = vmatpush1.msra.mxu0 %v628
        %630 = vmatprep.subr.mxu0 0.0
        %v631 = vand.u32 %v243, 4294901760
        %v632 = vsub.f32 %v243, %v631
        %v633 = vand.u32 %v632, 4294901760
        %634 = vmatpush1.msra.mxu0 %v633
        %635 = vmatprep.subr.mxu0 0.0
        %636 = vmatpush2.msra.mxu0 0.0
        %637 = vmatprep.subr.mxu0 0.0
        %638 = vmatpush2.msra.mxu0 0.0
        %639 = vmatprep.subr.mxu0 0.0
        %640 = vmatpush2.msra.mxu0 0.0
        %641 = vmatprep.subr.mxu0 0.0
        %642 = vmatpush2.msra.mxu0 0.0
        %643 = vmatprep.subr.mxu0 0.0
        %644 = vmatpush2.msra.mxu0 0.0
        %645 = vmatprep.subr.mxu0 0.0
        %646 = vmatpush2.msra.mxu0 0.0
        %647 = vmatprep.subr.mxu0 0.0
        %648 = vmatpush2.msra.mxu0 0.0
        %649 = vmatprep.subr.mxu0 0.0
        %650 = vmatpush2.msra.mxu0 0.0
        %651 = vmatprep.subr.mxu0 0.0
        %652 = vmatpush2.msra.mxu0 0.0
        %653 = vmatprep.subr.mxu0 0.0
        %654 = vmatpush2.msra.mxu0 0.0
        %655 = vmatprep.subr.mxu0 0.0
        %656 = vmatpush2.msra.mxu0 0.0
        %657 = vmatprep.subr.mxu0 0.0
        %658 = vmatpush2.msra.mxu0 0.0
        %659 = vmatprep.subr.mxu0 0.0
        %660 = vmatpush2.msra.mxu0 0.0
        %661 = vmatprep.subr.mxu0 0.0
        %662 = vmatpush2.msra.mxu0 0.0
        %663 = vmatprep.subr.mxu0 0.0
        %664 = vmatpush2.msra.mxu0 0.0
        %665 = vmatprep.subr.mxu0 0.0
        %666 = vmatpush2.msra.mxu0 0.0
        %667 = vmatprep.mubr.f32.mxu0 0.0
        %v668 = vand.u32 %v250, 4294901760
        %669 = vmatmul.mubr.f32.gmra.mxu0 %v668
        %v670 = vpop.f32.mrf.mxu0
        %v671 = vadd.f32 %v585, %v670
        %v672 = vpop.f32.mrf.mxu0
        %673 = vdwg.mxu0
        %674 = vmatprep.subr.mxu0 0.0
        %675 = vmatpush1.msra.mxu0 0.0
        %676 = vmatprep.subr.mxu0 0.0
        %677 = vmatpush1.msra.mxu0 0.0
        %678 = vmatprep.subr.mxu0 0.0
        %679 = vmatpush1.msra.mxu0 0.0
        %680 = vmatprep.subr.mxu0 0.0
        %681 = vmatpush1.msra.mxu0 0.0
        %682 = vmatprep.subr.mxu0 0.0
        %683 = vmatpush1.msra.mxu0 0.0
        %684 = vmatprep.subr.mxu0 0.0
        %685 = vmatpush1.msra.mxu0 0.0
        %686 = vmatprep.subr.mxu0 0.0
        %687 = vmatpush1.msra.mxu0 0.0
        %688 = vmatprep.subr.mxu0 0.0
        %689 = vmatpush1.msra.mxu0 0.0
        %690 = vmatprep.subr.mxu0 0.0
        %691 = vmatpush1.msra.mxu0 0.0
        %692 = vmatprep.subr.mxu0 0.0
        %693 = vmatpush1.msra.mxu0 0.0
        %694 = vmatprep.subr.mxu0 0.0
        %695 = vmatpush1.msra.mxu0 0.0
        %696 = vmatprep.subr.mxu0 0.0
        %v697 = vand.u32 %v247, 4294901760
        %698 = vmatpush1.msra.mxu0 %v697
        %699 = vmatprep.subr.mxu0 0.0
        %v700 = vand.u32 %v246, 4294901760
        %701 = vmatpush1.msra.mxu0 %v700
        %702 = vmatprep.subr.mxu0 0.0
        %v703 = vand.u32 %v245, 4294901760
        %704 = vmatpush1.msra.mxu0 %v703
        %705 = vmatprep.subr.mxu0 0.0
        %v706 = vand.u32 %v244, 4294901760
        %707 = vmatpush1.msra.mxu0 %v706
        %708 = vmatprep.subr.mxu0 0.0
        %v709 = vand.u32 %v243, 4294901760
        %710 = vmatpush1.msra.mxu0 %v709
        %711 = vmatprep.subr.mxu0 0.0
        %712 = vmatpush2.msra.mxu0 0.0
        %713 = vmatprep.subr.mxu0 0.0
        %714 = vmatpush2.msra.mxu0 0.0
        %715 = vmatprep.subr.mxu0 0.0
        %716 = vmatpush2.msra.mxu0 0.0
        %717 = vmatprep.subr.mxu0 0.0
        %718 = vmatpush2.msra.mxu0 0.0
        %719 = vmatprep.subr.mxu0 0.0
        %720 = vmatpush2.msra.mxu0 0.0
        %721 = vmatprep.subr.mxu0 0.0
        %722 = vmatpush2.msra.mxu0 0.0
        %723 = vmatprep.subr.mxu0 0.0
        %724 = vmatpush2.msra.mxu0 0.0
        %725 = vmatprep.subr.mxu0 0.0
        %726 = vmatpush2.msra.mxu0 0.0
        %727 = vmatprep.subr.mxu0 0.0
        %728 = vmatpush2.msra.mxu0 0.0
        %729 = vmatprep.subr.mxu0 0.0
        %730 = vmatpush2.msra.mxu0 0.0
        %731 = vmatprep.subr.mxu0 0.0
        %732 = vmatpush2.msra.mxu0 0.0
        %733 = vmatprep.subr.mxu0 0.0
        %734 = vmatpush2.msra.mxu0 0.0
        %735 = vmatprep.subr.mxu0 0.0
        %736 = vmatpush2.msra.mxu0 0.0
        %737 = vmatprep.subr.mxu0 0.0
        %738 = vmatpush2.msra.mxu0 0.0
        %739 = vmatprep.subr.mxu0 0.0
        %740 = vmatpush2.msra.mxu0 0.0
        %741 = vmatprep.subr.mxu0 0.0
        %742 = vmatpush2.msra.mxu0 0.0
        %743 = vmatprep.mubr.f32.mxu0 0.0
        %v744 = vand.u32 %v250, 4294901760
        %745 = vmatmul.mubr.f32.gmra.mxu0 %v744
        %v746 = vpop.f32.mrf.mxu0
        %v747 = vadd.f32 %v671, %v746
        %v748 = vpop.f32.mrf.mxu0
        %749 = vdwg.mxu0
        %v750 = vld [vmem:[#allocation7] sm:$0xff]
        %v751 = vld [vmem:[#allocation7 + $0x8] sm:$0xff]
        %v752 = vld [vmem:[#allocation7 + $0x10] sm:$0xff]
        %v753 = vld [vmem:[#allocation7 + $0x18] sm:$0xff]
        %v754 = vld [vmem:[#allocation7 + $0x20] sm:$0xff]
        %755 = vmatprep.subr.mxu0 0.0
        %756 = vmatpush1.msra.mxu0 0.0
        %757 = vmatprep.subr.mxu0 0.0
        %758 = vmatpush1.msra.mxu0 0.0
        %759 = vmatprep.subr.mxu0 0.0
        %760 = vmatpush1.msra.mxu0 0.0
        %761 = vmatprep.subr.mxu0 0.0
        %762 = vmatpush1.msra.mxu0 0.0
        %763 = vmatprep.subr.mxu0 0.0
        %764 = vmatpush1.msra.mxu0 0.0
        %765 = vmatprep.subr.mxu0 0.0
        %766 = vmatpush1.msra.mxu0 0.0
        %767 = vmatprep.subr.mxu0 0.0
        %768 = vmatpush1.msra.mxu0 0.0
        %769 = vmatprep.subr.mxu0 0.0
        %770 = vmatpush1.msra.mxu0 0.0
        %771 = vmatprep.subr.mxu0 0.0
        %772 = vmatpush1.msra.mxu0 0.0
        %773 = vmatprep.subr.mxu0 0.0
        %774 = vmatpush1.msra.mxu0 0.0
        %775 = vmatprep.subr.mxu0 0.0
        %776 = vmatpush1.msra.mxu0 0.0
        %777 = vmatprep.subr.mxu0 0.0
        %v778 = vand.u32 %v754, 4294901760
        %779 = vmatpush1.msra.mxu0 %v778
        %780 = vmatprep.subr.mxu0 0.0
        %v781 = vand.u32 %v753, 4294901760
        %782 = vmatpush1.msra.mxu0 %v781
        %783 = vmatprep.subr.mxu0 0.0
        %v784 = vand.u32 %v752, 4294901760
        %785 = vmatpush1.msra.mxu0 %v784
        %786 = vmatprep.subr.mxu0 0.0
        %v787 = vand.u32 %v751, 4294901760
        %788 = vmatpush1.msra.mxu0 %v787
        %789 = vmatprep.subr.mxu0 0.0
        %v790 = vand.u32 %v750, 4294901760
        %791 = vmatpush1.msra.mxu0 %v790
        %792 = vmatprep.subr.mxu0 0.0
        %793 = vmatpush2.msra.mxu0 0.0
        %794 = vmatprep.subr.mxu0 0.0
        %795 = vmatpush2.msra.mxu0 0.0
        %796 = vmatprep.subr.mxu0 0.0
        %797 = vmatpush2.msra.mxu0 0.0
        %798 = vmatprep.subr.mxu0 0.0
        %799 = vmatpush2.msra.mxu0 0.0
        %800 = vmatprep.subr.mxu0 0.0
        %801 = vmatpush2.msra.mxu0 0.0
        %802 = vmatprep.subr.mxu0 0.0
        %803 = vmatpush2.msra.mxu0 0.0
        %804 = vmatprep.subr.mxu0 0.0
        %805 = vmatpush2.msra.mxu0 0.0
        %806 = vmatprep.subr.mxu0 0.0
        %807 = vmatpush2.msra.mxu0 0.0
        %808 = vmatprep.subr.mxu0 0.0
        %809 = vmatpush2.msra.mxu0 0.0
        %810 = vmatprep.subr.mxu0 0.0
        %811 = vmatpush2.msra.mxu0 0.0
        %812 = vmatprep.subr.mxu0 0.0
        %813 = vmatpush2.msra.mxu0 0.0
        %814 = vmatprep.subr.mxu0 0.0
        %815 = vmatpush2.msra.mxu0 0.0
        %816 = vmatprep.subr.mxu0 0.0
        %817 = vmatpush2.msra.mxu0 0.0
        %818 = vmatprep.subr.mxu0 0.0
        %819 = vmatpush2.msra.mxu0 0.0
        %820 = vmatprep.subr.mxu0 0.0
        %821 = vmatpush2.msra.mxu0 0.0
        %822 = vmatprep.subr.mxu0 0.0
        %823 = vmatpush2.msra.mxu0 0.0
        %824 = vmatprep.mubr.f32.mxu0 0.0
        %v825 = vand.u32 %v250, 4294901760
        %v826 = vsub.f32 %v250, %v825
        %v827 = vand.u32 %v826, 4294901760
        %v828 = vsub.f32 %v826, %v827
        %v829 = vand.u32 %v828, 4294901760
        %830 = vmatmul.mubr.f32.gmra.mxu0 %v829
        %v831 = vpop.f32.mrf.mxu0
        %v832 = vadd.f32 0.0, %v831
        %v833 = vpop.f32.mrf.mxu0
        %834 = vdwg.mxu0
        %835 = vmatprep.subr.mxu0 0.0
        %836 = vmatpush1.msra.mxu0 0.0
        %837 = vmatprep.subr.mxu0 0.0
        %838 = vmatpush1.msra.mxu0 0.0
        %839 = vmatprep.subr.mxu0 0.0
        %840 = vmatpush1.msra.mxu0 0.0
        %841 = vmatprep.subr.mxu0 0.0
        %842 = vmatpush1.msra.mxu0 0.0
        %843 = vmatprep.subr.mxu0 0.0
        %844 = vmatpush1.msra.mxu0 0.0
        %845 = vmatprep.subr.mxu0 0.0
        %846 = vmatpush1.msra.mxu0 0.0
        %847 = vmatprep.subr.mxu0 0.0
        %848 = vmatpush1.msra.mxu0 0.0
        %849 = vmatprep.subr.mxu0 0.0
        %850 = vmatpush1.msra.mxu0 0.0
        %851 = vmatprep.subr.mxu0 0.0
        %852 = vmatpush1.msra.mxu0 0.0
        %853 = vmatprep.subr.mxu0 0.0
        %854 = vmatpush1.msra.mxu0 0.0
        %855 = vmatprep.subr.mxu0 0.0
        %856 = vmatpush1.msra.mxu0 0.0
        %857 = vmatprep.subr.mxu0 0.0
        %v858 = vand.u32 %v754, 4294901760
        %v859 = vsub.f32 %v754, %v858
        %v860 = vand.u32 %v859, 4294901760
        %v861 = vsub.f32 %v859, %v860
        %v862 = vand.u32 %v861, 4294901760
        %863 = vmatpush1.msra.mxu0 %v862
        %864 = vmatprep.subr.mxu0 0.0
        %v865 = vand.u32 %v753, 4294901760
        %v866 = vsub.f32 %v753, %v865
        %v867 = vand.u32 %v866, 4294901760
        %v868 = vsub.f32 %v866, %v867
        %v869 = vand.u32 %v868, 4294901760
        %870 = vmatpush1.msra.mxu0 %v869
        %871 = vmatprep.subr.mxu0 0.0
        %v872 = vand.u32 %v752, 4294901760
        %v873 = vsub.f32 %v752, %v872
        %v874 = vand.u32 %v873, 4294901760
        %v875 = vsub.f32 %v873, %v874
        %v876 = vand.u32 %v875, 4294901760
        %877 = vmatpush1.msra.mxu0 %v876
        %878 = vmatprep.subr.mxu0 0.0
        %v879 = vand.u32 %v751, 4294901760
        %v880 = vsub.f32 %v751, %v879
        %v881 = vand.u32 %v880, 4294901760
        %v882 = vsub.f32 %v880, %v881
        %v883 = vand.u32 %v882, 4294901760
        %884 = vmatpush1.msra.mxu0 %v883
        %885 = vmatprep.subr.mxu0 0.0
        %v886 = vand.u32 %v750, 4294901760
        %v887 = vsub.f32 %v750, %v886
        %v888 = vand.u32 %v887, 4294901760
        %v889 = vsub.f32 %v887, %v888
        %v890 = vand.u32 %v889, 4294901760
        %891 = vmatpush1.msra.mxu0 %v890
        %892 = vmatprep.subr.mxu0 0.0
        %893 = vmatpush2.msra.mxu0 0.0
        %894 = vmatprep.subr.mxu0 0.0
        %895 = vmatpush2.msra.mxu0 0.0
        %896 = vmatprep.subr.mxu0 0.0
        %897 = vmatpush2.msra.mxu0 0.0
        %898 = vmatprep.subr.mxu0 0.0
        %899 = vmatpush2.msra.mxu0 0.0
        %900 = vmatprep.subr.mxu0 0.0
        %901 = vmatpush2.msra.mxu0 0.0
        %902 = vmatprep.subr.mxu0 0.0
        %903 = vmatpush2.msra.mxu0 0.0
        %904 = vmatprep.subr.mxu0 0.0
        %905 = vmatpush2.msra.mxu0 0.0
        %906 = vmatprep.subr.mxu0 0.0
        %907 = vmatpush2.msra.mxu0 0.0
        %908 = vmatprep.subr.mxu0 0.0
        %909 = vmatpush2.msra.mxu0 0.0
        %910 = vmatprep.subr.mxu0 0.0
        %911 = vmatpush2.msra.mxu0 0.0
        %912 = vmatprep.subr.mxu0 0.0
        %913 = vmatpush2.msra.mxu0 0.0
        %914 = vmatprep.subr.mxu0 0.0
        %915 = vmatpush2.msra.mxu0 0.0
        %916 = vmatprep.subr.mxu0 0.0
        %917 = vmatpush2.msra.mxu0 0.0
        %918 = vmatprep.subr.mxu0 0.0
        %919 = vmatpush2.msra.mxu0 0.0
        %920 = vmatprep.subr.mxu0 0.0
        %921 = vmatpush2.msra.mxu0 0.0
        %922 = vmatprep.subr.mxu0 0.0
        %923 = vmatpush2.msra.mxu0 0.0
        %924 = vmatprep.mubr.f32.mxu0 0.0
        %v925 = vand.u32 %v250, 4294901760
        %926 = vmatmul.mubr.f32.gmra.mxu0 %v925
        %v927 = vpop.f32.mrf.mxu0
        %v928 = vadd.f32 %v832, %v927
        %v929 = vpop.f32.mrf.mxu0
        %930 = vdwg.mxu0
        %931 = vmatprep.subr.mxu0 0.0
        %932 = vmatpush1.msra.mxu0 0.0
        %933 = vmatprep.subr.mxu0 0.0
        %934 = vmatpush1.msra.mxu0 0.0
        %935 = vmatprep.subr.mxu0 0.0
        %936 = vmatpush1.msra.mxu0 0.0
        %937 = vmatprep.subr.mxu0 0.0
        %938 = vmatpush1.msra.mxu0 0.0
        %939 = vmatprep.subr.mxu0 0.0
        %940 = vmatpush1.msra.mxu0 0.0
        %941 = vmatprep.subr.mxu0 0.0
        %942 = vmatpush1.msra.mxu0 0.0
        %943 = vmatprep.subr.mxu0 0.0
        %944 = vmatpush1.msra.mxu0 0.0
        %945 = vmatprep.subr.mxu0 0.0
        %946 = vmatpush1.msra.mxu0 0.0
        %947 = vmatprep.subr.mxu0 0.0
        %948 = vmatpush1.msra.mxu0 0.0
        %949 = vmatprep.subr.mxu0 0.0
        %950 = vmatpush1.msra.mxu0 0.0
        %951 = vmatprep.subr.mxu0 0.0
        %952 = vmatpush1.msra.mxu0 0.0
        %953 = vmatprep.subr.mxu0 0.0
        %v954 = vand.u32 %v754, 4294901760
        %v955 = vsub.f32 %v754, %v954
        %956 = vmatpush1.msra.mxu0 %v955
        %957 = vmatprep.subr.mxu0 0.0
        %v958 = vand.u32 %v753, 4294901760
        %v959 = vsub.f32 %v753, %v958
        %960 = vmatpush1.msra.mxu0 %v959
        %961 = vmatprep.subr.mxu0 0.0
        %v962 = vand.u32 %v752, 4294901760
        %v963 = vsub.f32 %v752, %v962
        %964 = vmatpush1.msra.mxu0 %v963
        %965 = vmatprep.subr.mxu0 0.0
        %v966 = vand.u32 %v751, 4294901760
        %v967 = vsub.f32 %v751, %v966
        %968 = vmatpush1.msra.mxu0 %v967
        %969 = vmatprep.subr.mxu0 0.0
        %v970 = vand.u32 %v750, 4294901760
        %v971 = vsub.f32 %v750, %v970
        %972 = vmatpush1.msra.mxu0 %v971
        %973 = vmatprep.subr.mxu0 0.0
        %974 = vmatpush2.msra.mxu0 0.0
        %975 = vmatprep.subr.mxu0 0.0
        %976 = vmatpush2.msra.mxu0 0.0
        %977 = vmatprep.subr.mxu0 0.0
        %978 = vmatpush2.msra.mxu0 0.0
        %979 = vmatprep.subr.mxu0 0.0
        %980 = vmatpush2.msra.mxu0 0.0
        %981 = vmatprep.subr.mxu0 0.0
        %982 = vmatpush2.msra.mxu0 0.0
        %983 = vmatprep.subr.mxu0 0.0
        %984 = vmatpush2.msra.mxu0 0.0
        %985 = vmatprep.subr.mxu0 0.0
        %986 = vmatpush2.msra.mxu0 0.0
        %987 = vmatprep.subr.mxu0 0.0
        %988 = vmatpush2.msra.mxu0 0.0
        %989 = vmatprep.subr.mxu0 0.0
        %990 = vmatpush2.msra.mxu0 0.0
        %991 = vmatprep.subr.mxu0 0.0
        %992 = vmatpush2.msra.mxu0 0.0
        %993 = vmatprep.subr.mxu0 0.0
        %994 = vmatpush2.msra.mxu0 0.0
        %995 = vmatprep.subr.mxu0 0.0
        %996 = vmatpush2.msra.mxu0 0.0
        %997 = vmatprep.subr.mxu0 0.0
        %998 = vmatpush2.msra.mxu0 0.0
        %999 = vmatprep.subr.mxu0 0.0
        %1000 = vmatpush2.msra.mxu0 0.0
        %1001 = vmatprep.subr.mxu0 0.0
        %1002 = vmatpush2.msra.mxu0 0.0
        %1003 = vmatprep.subr.mxu0 0.0
        %1004 = vmatpush2.msra.mxu0 0.0
        %1005 = vmatprep.mubr.f32.mxu0 0.0
        %v1006 = vand.u32 %v250, 4294901760
        %v1007 = vsub.f32 %v250, %v1006
        %1008 = vmatmul.mubr.f32.gmra.mxu0 %v1007
        %v1009 = vpop.f32.mrf.mxu0
        %v1010 = vadd.f32 %v928, %v1009
        %v1011 = vpop.f32.mrf.mxu0
        %1012 = vdwg.mxu0
        %1013 = vmatprep.subr.mxu0 0.0
        %1014 = vmatpush1.msra.mxu0 0.0
        %1015 = vmatprep.subr.mxu0 0.0
        %1016 = vmatpush1.msra.mxu0 0.0
        %1017 = vmatprep.subr.mxu0 0.0
        %1018 = vmatpush1.msra.mxu0 0.0
        %1019 = vmatprep.subr.mxu0 0.0
        %1020 = vmatpush1.msra.mxu0 0.0
        %1021 = vmatprep.subr.mxu0 0.0
        %1022 = vmatpush1.msra.mxu0 0.0
        %1023 = vmatprep.subr.mxu0 0.0
        %1024 = vmatpush1.msra.mxu0 0.0
        %1025 = vmatprep.subr.mxu0 0.0
        %1026 = vmatpush1.msra.mxu0 0.0
        %1027 = vmatprep.subr.mxu0 0.0
        %1028 = vmatpush1.msra.mxu0 0.0
        %1029 = vmatprep.subr.mxu0 0.0
        %1030 = vmatpush1.msra.mxu0 0.0
        %1031 = vmatprep.subr.mxu0 0.0
        %1032 = vmatpush1.msra.mxu0 0.0
        %1033 = vmatprep.subr.mxu0 0.0
        %1034 = vmatpush1.msra.mxu0 0.0
        %1035 = vmatprep.subr.mxu0 0.0
        %v1036 = vand.u32 %v754, 4294901760
        %1037 = vmatpush1.msra.mxu0 %v1036
        %1038 = vmatprep.subr.mxu0 0.0
        %v1039 = vand.u32 %v753, 4294901760
        %1040 = vmatpush1.msra.mxu0 %v1039
        %1041 = vmatprep.subr.mxu0 0.0
        %v1042 = vand.u32 %v752, 4294901760
        %1043 = vmatpush1.msra.mxu0 %v1042
        %1044 = vmatprep.subr.mxu0 0.0
        %v1045 = vand.u32 %v751, 4294901760
        %1046 = vmatpush1.msra.mxu0 %v1045
        %1047 = vmatprep.subr.mxu0 0.0
        %v1048 = vand.u32 %v750, 4294901760
        %1049 = vmatpush1.msra.mxu0 %v1048
        %1050 = vmatprep.subr.mxu0 0.0
        %1051 = vmatpush2.msra.mxu0 0.0
        %1052 = vmatprep.subr.mxu0 0.0
        %1053 = vmatpush2.msra.mxu0 0.0
        %1054 = vmatprep.subr.mxu0 0.0
        %1055 = vmatpush2.msra.mxu0 0.0
        %1056 = vmatprep.subr.mxu0 0.0
        %1057 = vmatpush2.msra.mxu0 0.0
        %1058 = vmatprep.subr.mxu0 0.0
        %1059 = vmatpush2.msra.mxu0 0.0
        %1060 = vmatprep.subr.mxu0 0.0
        %1061 = vmatpush2.msra.mxu0 0.0
        %1062 = vmatprep.subr.mxu0 0.0
        %1063 = vmatpush2.msra.mxu0 0.0
        %1064 = vmatprep.subr.mxu0 0.0
        %1065 = vmatpush2.msra.mxu0 0.0
        %1066 = vmatprep.subr.mxu0 0.0
        %1067 = vmatpush2.msra.mxu0 0.0
        %1068 = vmatprep.subr.mxu0 0.0
        %1069 = vmatpush2.msra.mxu0 0.0
        %1070 = vmatprep.subr.mxu0 0.0
        %1071 = vmatpush2.msra.mxu0 0.0
        %1072 = vmatprep.subr.mxu0 0.0
        %1073 = vmatpush2.msra.mxu0 0.0
        %1074 = vmatprep.subr.mxu0 0.0
        %1075 = vmatpush2.msra.mxu0 0.0
        %1076 = vmatprep.subr.mxu0 0.0
        %1077 = vmatpush2.msra.mxu0 0.0
        %1078 = vmatprep.subr.mxu0 0.0
        %1079 = vmatpush2.msra.mxu0 0.0
        %1080 = vmatprep.subr.mxu0 0.0
        %1081 = vmatpush2.msra.mxu0 0.0
        %1082 = vmatprep.mubr.f32.mxu0 0.0
        %v1083 = vand.u32 %v250, 4294901760
        %v1084 = vsub.f32 %v250, %v1083
        %v1085 = vand.u32 %v1084, 4294901760
        %1086 = vmatmul.mubr.f32.gmra.mxu0 %v1085
        %v1087 = vpop.f32.mrf.mxu0
        %v1088 = vadd.f32 %v1010, %v1087
        %v1089 = vpop.f32.mrf.mxu0
        %1090 = vdwg.mxu0
        %1091 = vmatprep.subr.mxu0 0.0
        %1092 = vmatpush1.msra.mxu0 0.0
        %1093 = vmatprep.subr.mxu0 0.0
        %1094 = vmatpush1.msra.mxu0 0.0
        %1095 = vmatprep.subr.mxu0 0.0
        %1096 = vmatpush1.msra.mxu0 0.0
        %1097 = vmatprep.subr.mxu0 0.0
        %1098 = vmatpush1.msra.mxu0 0.0
        %1099 = vmatprep.subr.mxu0 0.0
        %1100 = vmatpush1.msra.mxu0 0.0
        %1101 = vmatprep.subr.mxu0 0.0
        %1102 = vmatpush1.msra.mxu0 0.0
        %1103 = vmatprep.subr.mxu0 0.0
        %1104 = vmatpush1.msra.mxu0 0.0
        %1105 = vmatprep.subr.mxu0 0.0
        %1106 = vmatpush1.msra.mxu0 0.0
        %1107 = vmatprep.subr.mxu0 0.0
        %1108 = vmatpush1.msra.mxu0 0.0
        %1109 = vmatprep.subr.mxu0 0.0
        %1110 = vmatpush1.msra.mxu0 0.0
        %1111 = vmatprep.subr.mxu0 0.0
        %1112 = vmatpush1.msra.mxu0 0.0
        %1113 = vmatprep.subr.mxu0 0.0
        %v1114 = vand.u32 %v754, 4294901760
        %v1115 = vsub.f32 %v754, %v1114
        %v1116 = vand.u32 %v1115, 4294901760
        %1117 = vmatpush1.msra.mxu0 %v1116
        %1118 = vmatprep.subr.mxu0 0.0
        %v1119 = vand.u32 %v753, 4294901760
        %v1120 = vsub.f32 %v753, %v1119
        %v1121 = vand.u32 %v1120, 4294901760
        %1122 = vmatpush1.msra.mxu0 %v1121
        %1123 = vmatprep.subr.mxu0 0.0
        %v1124 = vand.u32 %v752, 4294901760
        %v1125 = vsub.f32 %v752, %v1124
        %v1126 = vand.u32 %v1125, 4294901760
        %1127 = vmatpush1.msra.mxu0 %v1126
        %1128 = vmatprep.subr.mxu0 0.0
        %v1129 = vand.u32 %v751, 4294901760
        %v1130 = vsub.f32 %v751, %v1129
        %v1131 = vand.u32 %v1130, 4294901760
        %1132 = vmatpush1.msra.mxu0 %v1131
        %1133 = vmatprep.subr.mxu0 0.0
        %v1134 = vand.u32 %v750, 4294901760
        %v1135 = vsub.f32 %v750, %v1134
        %v1136 = vand.u32 %v1135, 4294901760
        %1137 = vmatpush1.msra.mxu0 %v1136
        %1138 = vmatprep.subr.mxu0 0.0
        %1139 = vmatpush2.msra.mxu0 0.0
        %1140 = vmatprep.subr.mxu0 0.0
        %1141 = vmatpush2.msra.mxu0 0.0
        %1142 = vmatprep.subr.mxu0 0.0
        %1143 = vmatpush2.msra.mxu0 0.0
        %1144 = vmatprep.subr.mxu0 0.0
        %1145 = vmatpush2.msra.mxu0 0.0
        %1146 = vmatprep.subr.mxu0 0.0
        %1147 = vmatpush2.msra.mxu0 0.0
        %1148 = vmatprep.subr.mxu0 0.0
        %1149 = vmatpush2.msra.mxu0 0.0
        %1150 = vmatprep.subr.mxu0 0.0
        %1151 = vmatpush2.msra.mxu0 0.0
        %1152 = vmatprep.subr.mxu0 0.0
        %1153 = vmatpush2.msra.mxu0 0.0
        %1154 = vmatprep.subr.mxu0 0.0
        %1155 = vmatpush2.msra.mxu0 0.0
        %1156 = vmatprep.subr.mxu0 0.0
        %1157 = vmatpush2.msra.mxu0 0.0
        %1158 = vmatprep.subr.mxu0 0.0
        %1159 = vmatpush2.msra.mxu0 0.0
        %1160 = vmatprep.subr.mxu0 0.0
        %1161 = vmatpush2.msra.mxu0 0.0
        %1162 = vmatprep.subr.mxu0 0.0
        %1163 = vmatpush2.msra.mxu0 0.0
        %1164 = vmatprep.subr.mxu0 0.0
        %1165 = vmatpush2.msra.mxu0 0.0
        %1166 = vmatprep.subr.mxu0 0.0
        %1167 = vmatpush2.msra.mxu0 0.0
        %1168 = vmatprep.subr.mxu0 0.0
        %1169 = vmatpush2.msra.mxu0 0.0
        %1170 = vmatprep.mubr.f32.mxu0 0.0
        %v1171 = vand.u32 %v250, 4294901760
        %1172 = vmatmul.mubr.f32.gmra.mxu0 %v1171
        %v1173 = vpop.f32.mrf.mxu0
        %v1174 = vadd.f32 %v1088, %v1173
        %v1175 = vpop.f32.mrf.mxu0
        %1176 = vdwg.mxu0
        %1177 = vmatprep.subr.mxu0 0.0
        %1178 = vmatpush1.msra.mxu0 0.0
        %1179 = vmatprep.subr.mxu0 0.0
        %1180 = vmatpush1.msra.mxu0 0.0
        %1181 = vmatprep.subr.mxu0 0.0
        %1182 = vmatpush1.msra.mxu0 0.0
        %1183 = vmatprep.subr.mxu0 0.0
        %1184 = vmatpush1.msra.mxu0 0.0
        %1185 = vmatprep.subr.mxu0 0.0
        %1186 = vmatpush1.msra.mxu0 0.0
        %1187 = vmatprep.subr.mxu0 0.0
        %1188 = vmatpush1.msra.mxu0 0.0
        %1189 = vmatprep.subr.mxu0 0.0
        %1190 = vmatpush1.msra.mxu0 0.0
        %1191 = vmatprep.subr.mxu0 0.0
        %1192 = vmatpush1.msra.mxu0 0.0
        %1193 = vmatprep.subr.mxu0 0.0
        %1194 = vmatpush1.msra.mxu0 0.0
        %1195 = vmatprep.subr.mxu0 0.0
        %1196 = vmatpush1.msra.mxu0 0.0
        %1197 = vmatprep.subr.mxu0 0.0
        %1198 = vmatpush1.msra.mxu0 0.0
        %1199 = vmatprep.subr.mxu0 0.0
        %v1200 = vand.u32 %v754, 4294901760
        %1201 = vmatpush1.msra.mxu0 %v1200
        %1202 = vmatprep.subr.mxu0 0.0
        %v1203 = vand.u32 %v753, 4294901760
        %1204 = vmatpush1.msra.mxu0 %v1203
        %1205 = vmatprep.subr.mxu0 0.0
        %v1206 = vand.u32 %v752, 4294901760
        %1207 = vmatpush1.msra.mxu0 %v1206
        %1208 = vmatprep.subr.mxu0 0.0
        %v1209 = vand.u32 %v751, 4294901760
        %1210 = vmatpush1.msra.mxu0 %v1209
        %1211 = vmatprep.subr.mxu0 0.0
        %v1212 = vand.u32 %v750, 4294901760
        %1213 = vmatpush1.msra.mxu0 %v1212
        %1214 = vmatprep.subr.mxu0 0.0
        %1215 = vmatpush2.msra.mxu0 0.0
        %1216 = vmatprep.subr.mxu0 0.0
        %1217 = vmatpush2.msra.mxu0 0.0
        %1218 = vmatprep.subr.mxu0 0.0
        %1219 = vmatpush2.msra.mxu0 0.0
        %1220 = vmatprep.subr.mxu0 0.0
        %1221 = vmatpush2.msra.mxu0 0.0
        %1222 = vmatprep.subr.mxu0 0.0
        %1223 = vmatpush2.msra.mxu0 0.0
        %1224 = vmatprep.subr.mxu0 0.0
        %1225 = vmatpush2.msra.mxu0 0.0
        %1226 = vmatprep.subr.mxu0 0.0
        %1227 = vmatpush2.msra.mxu0 0.0
        %1228 = vmatprep.subr.mxu0 0.0
        %1229 = vmatpush2.msra.mxu0 0.0
        %1230 = vmatprep.subr.mxu0 0.0
        %1231 = vmatpush2.msra.mxu0 0.0
        %1232 = vmatprep.subr.mxu0 0.0
        %1233 = vmatpush2.msra.mxu0 0.0
        %1234 = vmatprep.subr.mxu0 0.0
        %1235 = vmatpush2.msra.mxu0 0.0
        %1236 = vmatprep.subr.mxu0 0.0
        %1237 = vmatpush2.msra.mxu0 0.0
        %1238 = vmatprep.subr.mxu0 0.0
        %1239 = vmatpush2.msra.mxu0 0.0
        %1240 = vmatprep.subr.mxu0 0.0
        %1241 = vmatpush2.msra.mxu0 0.0
        %1242 = vmatprep.subr.mxu0 0.0
        %1243 = vmatpush2.msra.mxu0 0.0
        %1244 = vmatprep.subr.mxu0 0.0
        %1245 = vmatpush2.msra.mxu0 0.0
        %1246 = vmatprep.mubr.f32.mxu0 0.0
        %v1247 = vand.u32 %v250, 4294901760
        %1248 = vmatmul.mubr.f32.gmra.mxu0 %v1247
        %v1249 = vpop.f32.mrf.mxu0
        %v1250 = vadd.f32 %v1174, %v1249
        %v1251 = vpop.f32.mrf.mxu0
        %1252 = vdwg.mxu0
        %v1253 = vmul.f32 %v242, %v242
        %v1255 = vsel %vm248, %v1253, 0
        %1257 = vmatprep.subr.mxu0 0.0
        %1258 = vmatpush1.msra.mxu0 0.0
        %1259 = vmatprep.subr.mxu0 0.0
        %1260 = vmatpush1.msra.mxu0 0.0
        %1261 = vmatprep.subr.mxu0 0.0
        %1262 = vmatpush1.msra.mxu0 0.0
        %1263 = vmatprep.subr.mxu0 0.0
        %1264 = vmatpush1.msra.mxu0 0.0
        %1265 = vmatprep.subr.mxu0 0.0
        %1266 = vmatpush1.msra.mxu0 0.0
        %1267 = vmatprep.subr.mxu0 0.0
        %1268 = vmatpush1.msra.mxu0 0.0
        %1269 = vmatprep.subr.mxu0 0.0
        %1270 = vmatpush1.msra.mxu0 0.0
        %1271 = vmatprep.subr.mxu0 0.0
        %1272 = vmatpush1.msra.mxu0 0.0
        %1273 = vmatprep.subr.mxu0 0.0
        %1274 = vmatpush1.msra.mxu0 0.0
        %1275 = vmatprep.subr.mxu0 0.0
        %1276 = vmatpush1.msra.mxu0 0.0
        %1277 = vmatprep.subr.mxu0 0.0
        %1278 = vmatpush1.msra.mxu0 0.0
        %1279 = vmatprep.subr.mxu0 0.0
        %v1280 = vand.u32 %v754, 4294901760
        %1281 = vmatpush1.msra.mxu0 %v1280
        %1282 = vmatprep.subr.mxu0 0.0
        %v1283 = vand.u32 %v753, 4294901760
        %1284 = vmatpush1.msra.mxu0 %v1283
        %1285 = vmatprep.subr.mxu0 0.0
        %v1286 = vand.u32 %v752, 4294901760
        %1287 = vmatpush1.msra.mxu0 %v1286
        %1288 = vmatprep.subr.mxu0 0.0
        %v1289 = vand.u32 %v751, 4294901760
        %1290 = vmatpush1.msra.mxu0 %v1289
        %1291 = vmatprep.subr.mxu0 0.0
        %v1292 = vand.u32 %v750, 4294901760
        %1293 = vmatpush1.msra.mxu0 %v1292
        %1294 = vmatprep.subr.mxu0 0.0
        %1295 = vmatpush2.msra.mxu0 0.0
        %1296 = vmatprep.subr.mxu0 0.0
        %1297 = vmatpush2.msra.mxu0 0.0
        %1298 = vmatprep.subr.mxu0 0.0
        %1299 = vmatpush2.msra.mxu0 0.0
        %1300 = vmatprep.subr.mxu0 0.0
        %1301 = vmatpush2.msra.mxu0 0.0
        %1302 = vmatprep.subr.mxu0 0.0
        %1303 = vmatpush2.msra.mxu0 0.0
        %1304 = vmatprep.subr.mxu0 0.0
        %1305 = vmatpush2.msra.mxu0 0.0
        %1306 = vmatprep.subr.mxu0 0.0
        %1307 = vmatpush2.msra.mxu0 0.0
        %1308 = vmatprep.subr.mxu0 0.0
        %1309 = vmatpush2.msra.mxu0 0.0
        %1310 = vmatprep.subr.mxu0 0.0
        %1311 = vmatpush2.msra.mxu0 0.0
        %1312 = vmatprep.subr.mxu0 0.0
        %1313 = vmatpush2.msra.mxu0 0.0
        %1314 = vmatprep.subr.mxu0 0.0
        %1315 = vmatpush2.msra.mxu0 0.0
        %1316 = vmatprep.subr.mxu0 0.0
        %1317 = vmatpush2.msra.mxu0 0.0
        %1318 = vmatprep.subr.mxu0 0.0
        %1319 = vmatpush2.msra.mxu0 0.0
        %1320 = vmatprep.subr.mxu0 0.0
        %1321 = vmatpush2.msra.mxu0 0.0
        %1322 = vmatprep.subr.mxu0 0.0
        %1323 = vmatpush2.msra.mxu0 0.0
        %1324 = vmatprep.subr.mxu0 0.0
        %1325 = vmatpush2.msra.mxu0 0.0
        %1326 = vmatprep.mubr.f32.mxu0 0.0
        %v1327 = vand.u32 %v1255, 4294901760
        %v1328 = vsub.f32 %v1255, %v1327
        %v1329 = vand.u32 %v1328, 4294901760
        %v1330 = vsub.f32 %v1328, %v1329
        %v1331 = vand.u32 %v1330, 4294901760
        %1332 = vmatmul.mubr.f32.gmra.mxu0 %v1331
        %v1333 = vpop.f32.mrf.mxu0
        %v1334 = vadd.f32 0.0, %v1333
        %v1335 = vpop.f32.mrf.mxu0
        %1336 = vdwg.mxu0
        %1337 = vmatprep.subr.mxu0 0.0
        %1338 = vmatpush1.msra.mxu0 0.0
        %1339 = vmatprep.subr.mxu0 0.0
        %1340 = vmatpush1.msra.mxu0 0.0
        %1341 = vmatprep.subr.mxu0 0.0
        %1342 = vmatpush1.msra.mxu0 0.0
        %1343 = vmatprep.subr.mxu0 0.0
        %1344 = vmatpush1.msra.mxu0 0.0
        %1345 = vmatprep.subr.mxu0 0.0
        %1346 = vmatpush1.msra.mxu0 0.0
        %1347 = vmatprep.subr.mxu0 0.0
        %1348 = vmatpush1.msra.mxu0 0.0
        %1349 = vmatprep.subr.mxu0 0.0
        %1350 = vmatpush1.msra.mxu0 0.0
        %1351 = vmatprep.subr.mxu0 0.0
        %1352 = vmatpush1.msra.mxu0 0.0
        %1353 = vmatprep.subr.mxu0 0.0
        %1354 = vmatpush1.msra.mxu0 0.0
        %1355 = vmatprep.subr.mxu0 0.0
        %1356 = vmatpush1.msra.mxu0 0.0
        %1357 = vmatprep.subr.mxu0 0.0
        %1358 = vmatpush1.msra.mxu0 0.0
        %1359 = vmatprep.subr.mxu0 0.0
        %v1360 = vand.u32 %v754, 4294901760
        %v1361 = vsub.f32 %v754, %v1360
        %v1362 = vand.u32 %v1361, 4294901760
        %v1363 = vsub.f32 %v1361, %v1362
        %v1364 = vand.u32 %v1363, 4294901760
        %1365 = vmatpush1.msra.mxu0 %v1364
        %1366 = vmatprep.subr.mxu0 0.0
        %v1367 = vand.u32 %v753, 4294901760
        %v1368 = vsub.f32 %v753, %v1367
        %v1369 = vand.u32 %v1368, 4294901760
        %v1370 = vsub.f32 %v1368, %v1369
        %v1371 = vand.u32 %v1370, 4294901760
        %1372 = vmatpush1.msra.mxu0 %v1371
        %1373 = vmatprep.subr.mxu0 0.0
        %v1374 = vand.u32 %v752, 4294901760
        %v1375 = vsub.f32 %v752, %v1374
        %v1376 = vand.u32 %v1375, 4294901760
        %v1377 = vsub.f32 %v1375, %v1376
        %v1378 = vand.u32 %v1377, 4294901760
        %1379 = vmatpush1.msra.mxu0 %v1378
        %1380 = vmatprep.subr.mxu0 0.0
        %v1381 = vand.u32 %v751, 4294901760
        %v1382 = vsub.f32 %v751, %v1381
        %v1383 = vand.u32 %v1382, 4294901760
        %v1384 = vsub.f32 %v1382, %v1383
        %v1385 = vand.u32 %v1384, 4294901760
        %1386 = vmatpush1.msra.mxu0 %v1385
        %1387 = vmatprep.subr.mxu0 0.0
        %v1388 = vand.u32 %v750, 4294901760
        %v1389 = vsub.f32 %v750, %v1388
        %v1390 = vand.u32 %v1389, 4294901760
        %v1391 = vsub.f32 %v1389, %v1390
        %v1392 = vand.u32 %v1391, 4294901760
        %1393 = vmatpush1.msra.mxu0 %v1392
        %1394 = vmatprep.subr.mxu0 0.0
        %1395 = vmatpush2.msra.mxu0 0.0
        %1396 = vmatprep.subr.mxu0 0.0
        %1397 = vmatpush2.msra.mxu0 0.0
        %1398 = vmatprep.subr.mxu0 0.0
        %1399 = vmatpush2.msra.mxu0 0.0
        %1400 = vmatprep.subr.mxu0 0.0
        %1401 = vmatpush2.msra.mxu0 0.0
        %1402 = vmatprep.subr.mxu0 0.0
        %1403 = vmatpush2.msra.mxu0 0.0
        %1404 = vmatprep.subr.mxu0 0.0
        %1405 = vmatpush2.msra.mxu0 0.0
        %1406 = vmatprep.subr.mxu0 0.0
        %1407 = vmatpush2.msra.mxu0 0.0
        %1408 = vmatprep.subr.mxu0 0.0
        %1409 = vmatpush2.msra.mxu0 0.0
        %1410 = vmatprep.subr.mxu0 0.0
        %1411 = vmatpush2.msra.mxu0 0.0
        %1412 = vmatprep.subr.mxu0 0.0
        %1413 = vmatpush2.msra.mxu0 0.0
        %1414 = vmatprep.subr.mxu0 0.0
        %1415 = vmatpush2.msra.mxu0 0.0
        %1416 = vmatprep.subr.mxu0 0.0
        %1417 = vmatpush2.msra.mxu0 0.0
        %1418 = vmatprep.subr.mxu0 0.0
        %1419 = vmatpush2.msra.mxu0 0.0
        %1420 = vmatprep.subr.mxu0 0.0
        %1421 = vmatpush2.msra.mxu0 0.0
        %1422 = vmatprep.subr.mxu0 0.0
        %1423 = vmatpush2.msra.mxu0 0.0
        %1424 = vmatprep.subr.mxu0 0.0
        %1425 = vmatpush2.msra.mxu0 0.0
        %1426 = vmatprep.mubr.f32.mxu0 0.0
        %v1427 = vand.u32 %v1255, 4294901760
        %1428 = vmatmul.mubr.f32.gmra.mxu0 %v1427
        %v1429 = vpop.f32.mrf.mxu0
        %v1430 = vadd.f32 %v1334, %v1429
        %v1431 = vpop.f32.mrf.mxu0
        %1432 = vdwg.mxu0
        %1433 = vmatprep.subr.mxu0 0.0
        %1434 = vmatpush1.msra.mxu0 0.0
        %1435 = vmatprep.subr.mxu0 0.0
        %1436 = vmatpush1.msra.mxu0 0.0
        %1437 = vmatprep.subr.mxu0 0.0
        %1438 = vmatpush1.msra.mxu0 0.0
        %1439 = vmatprep.subr.mxu0 0.0
        %1440 = vmatpush1.msra.mxu0 0.0
        %1441 = vmatprep.subr.mxu0 0.0
        %1442 = vmatpush1.msra.mxu0 0.0
        %1443 = vmatprep.subr.mxu0 0.0
        %1444 = vmatpush1.msra.mxu0 0.0
        %1445 = vmatprep.subr.mxu0 0.0
        %1446 = vmatpush1.msra.mxu0 0.0
        %1447 = vmatprep.subr.mxu0 0.0
        %1448 = vmatpush1.msra.mxu0 0.0
        %1449 = vmatprep.subr.mxu0 0.0
        %1450 = vmatpush1.msra.mxu0 0.0
        %1451 = vmatprep.subr.mxu0 0.0
        %1452 = vmatpush1.msra.mxu0 0.0
        %1453 = vmatprep.subr.mxu0 0.0
        %1454 = vmatpush1.msra.mxu0 0.0
        %1455 = vmatprep.subr.mxu0 0.0
        %v1456 = vand.u32 %v754, 4294901760
        %v1457 = vsub.f32 %v754, %v1456
        %1458 = vmatpush1.msra.mxu0 %v1457
        %1459 = vmatprep.subr.mxu0 0.0
        %v1460 = vand.u32 %v753, 4294901760
        %v1461 = vsub.f32 %v753, %v1460
        %1462 = vmatpush1.msra.mxu0 %v1461
        %1463 = vmatprep.subr.mxu0 0.0
        %v1464 = vand.u32 %v752, 4294901760
        %v1465 = vsub.f32 %v752, %v1464
        %1466 = vmatpush1.msra.mxu0 %v1465
        %1467 = vmatprep.subr.mxu0 0.0
        %v1468 = vand.u32 %v751, 4294901760
        %v1469 = vsub.f32 %v751, %v1468
        %1470 = vmatpush1.msra.mxu0 %v1469
        %1471 = vmatprep.subr.mxu0 0.0
        %v1472 = vand.u32 %v750, 4294901760
        %v1473 = vsub.f32 %v750, %v1472
        %1474 = vmatpush1.msra.mxu0 %v1473
        %1475 = vmatprep.subr.mxu0 0.0
        %1476 = vmatpush2.msra.mxu0 0.0
        %1477 = vmatprep.subr.mxu0 0.0
        %1478 = vmatpush2.msra.mxu0 0.0
        %1479 = vmatprep.subr.mxu0 0.0
        %1480 = vmatpush2.msra.mxu0 0.0
        %1481 = vmatprep.subr.mxu0 0.0
        %1482 = vmatpush2.msra.mxu0 0.0
        %1483 = vmatprep.subr.mxu0 0.0
        %1484 = vmatpush2.msra.mxu0 0.0
        %1485 = vmatprep.subr.mxu0 0.0
        %1486 = vmatpush2.msra.mxu0 0.0
        %1487 = vmatprep.subr.mxu0 0.0
        %1488 = vmatpush2.msra.mxu0 0.0
        %1489 = vmatprep.subr.mxu0 0.0
        %1490 = vmatpush2.msra.mxu0 0.0
        %1491 = vmatprep.subr.mxu0 0.0
        %1492 = vmatpush2.msra.mxu0 0.0
        %1493 = vmatprep.subr.mxu0 0.0
        %1494 = vmatpush2.msra.mxu0 0.0
        %1495 = vmatprep.subr.mxu0 0.0
        %1496 = vmatpush2.msra.mxu0 0.0
        %1497 = vmatprep.subr.mxu0 0.0
        %1498 = vmatpush2.msra.mxu0 0.0
        %1499 = vmatprep.subr.mxu0 0.0
        %1500 = vmatpush2.msra.mxu0 0.0
        %1501 = vmatprep.subr.mxu0 0.0
        %1502 = vmatpush2.msra.mxu0 0.0
        %1503 = vmatprep.subr.mxu0 0.0
        %1504 = vmatpush2.msra.mxu0 0.0
        %1505 = vmatprep.subr.mxu0 0.0
        %1506 = vmatpush2.msra.mxu0 0.0
        %1507 = vmatprep.mubr.f32.mxu0 0.0
        %v1508 = vand.u32 %v1255, 4294901760
        %v1509 = vsub.f32 %v1255, %v1508
        %1510 = vmatmul.mubr.f32.gmra.mxu0 %v1509
        %v1511 = vpop.f32.mrf.mxu0
        %v1512 = vadd.f32 %v1430, %v1511
        %v1513 = vpop.f32.mrf.mxu0
        %1514 = vdwg.mxu0
        %1515 = vmatprep.subr.mxu0 0.0
        %1516 = vmatpush1.msra.mxu0 0.0
        %1517 = vmatprep.subr.mxu0 0.0
        %1518 = vmatpush1.msra.mxu0 0.0
        %1519 = vmatprep.subr.mxu0 0.0
        %1520 = vmatpush1.msra.mxu0 0.0
        %1521 = vmatprep.subr.mxu0 0.0
        %1522 = vmatpush1.msra.mxu0 0.0
        %1523 = vmatprep.subr.mxu0 0.0
        %1524 = vmatpush1.msra.mxu0 0.0
        %1525 = vmatprep.subr.mxu0 0.0
        %1526 = vmatpush1.msra.mxu0 0.0
        %1527 = vmatprep.subr.mxu0 0.0
        %1528 = vmatpush1.msra.mxu0 0.0
        %1529 = vmatprep.subr.mxu0 0.0
        %1530 = vmatpush1.msra.mxu0 0.0
        %1531 = vmatprep.subr.mxu0 0.0
        %1532 = vmatpush1.msra.mxu0 0.0
        %1533 = vmatprep.subr.mxu0 0.0
        %1534 = vmatpush1.msra.mxu0 0.0
        %1535 = vmatprep.subr.mxu0 0.0
        %1536 = vmatpush1.msra.mxu0 0.0
        %1537 = vmatprep.subr.mxu0 0.0
        %v1538 = vand.u32 %v754, 4294901760
        %1539 = vmatpush1.msra.mxu0 %v1538
        %1540 = vmatprep.subr.mxu0 0.0
        %v1541 = vand.u32 %v753, 4294901760
        %1542 = vmatpush1.msra.mxu0 %v1541
        %1543 = vmatprep.subr.mxu0 0.0
        %v1544 = vand.u32 %v752, 4294901760
        %1545 = vmatpush1.msra.mxu0 %v1544
        %1546 = vmatprep.subr.mxu0 0.0
        %v1547 = vand.u32 %v751, 4294901760
        %1548 = vmatpush1.msra.mxu0 %v1547
        %1549 = vmatprep.subr.mxu0 0.0
        %v1550 = vand.u32 %v750, 4294901760
        %1551 = vmatpush1.msra.mxu0 %v1550
        %1552 = vmatprep.subr.mxu0 0.0
        %1553 = vmatpush2.msra.mxu0 0.0
        %1554 = vmatprep.subr.mxu0 0.0
        %1555 = vmatpush2.msra.mxu0 0.0
        %1556 = vmatprep.subr.mxu0 0.0
        %1557 = vmatpush2.msra.mxu0 0.0
        %1558 = vmatprep.subr.mxu0 0.0
        %1559 = vmatpush2.msra.mxu0 0.0
        %1560 = vmatprep.subr.mxu0 0.0
        %1561 = vmatpush2.msra.mxu0 0.0
        %1562 = vmatprep.subr.mxu0 0.0
        %1563 = vmatpush2.msra.mxu0 0.0
        %1564 = vmatprep.subr.mxu0 0.0
        %1565 = vmatpush2.msra.mxu0 0.0
        %1566 = vmatprep.subr.mxu0 0.0
        %1567 = vmatpush2.msra.mxu0 0.0
        %1568 = vmatprep.subr.mxu0 0.0
        %1569 = vmatpush2.msra.mxu0 0.0
        %1570 = vmatprep.subr.mxu0 0.0
        %1571 = vmatpush2.msra.mxu0 0.0
        %1572 = vmatprep.subr.mxu0 0.0
        %1573 = vmatpush2.msra.mxu0 0.0
        %1574 = vmatprep.subr.mxu0 0.0
        %1575 = vmatpush2.msra.mxu0 0.0
        %1576 = vmatprep.subr.mxu0 0.0
        %1577 = vmatpush2.msra.mxu0 0.0
        %1578 = vmatprep.subr.mxu0 0.0
        %1579 = vmatpush2.msra.mxu0 0.0
        %1580 = vmatprep.subr.mxu0 0.0
        %1581 = vmatpush2.msra.mxu0 0.0
        %1582 = vmatprep.subr.mxu0 0.0
        %1583 = vmatpush2.msra.mxu0 0.0
        %1584 = vmatprep.mubr.f32.mxu0 0.0
        %v1585 = vand.u32 %v1255, 4294901760
        %v1586 = vsub.f32 %v1255, %v1585
        %v1587 = vand.u32 %v1586, 4294901760
        %1588 = vmatmul.mubr.f32.gmra.mxu0 %v1587
        %v1589 = vpop.f32.mrf.mxu0
        %v1590 = vadd.f32 %v1512, %v1589
        %v1591 = vpop.f32.mrf.mxu0
        %1592 = vdwg.mxu0
        %1593 = vmatprep.subr.mxu0 0.0
        %1594 = vmatpush1.msra.mxu0 0.0
        %1595 = vmatprep.subr.mxu0 0.0
        %1596 = vmatpush1.msra.mxu0 0.0
        %1597 = vmatprep.subr.mxu0 0.0
        %1598 = vmatpush1.msra.mxu0 0.0
        %1599 = vmatprep.subr.mxu0 0.0
        %1600 = vmatpush1.msra.mxu0 0.0
        %1601 = vmatprep.subr.mxu0 0.0
        %1602 = vmatpush1.msra.mxu0 0.0
        %1603 = vmatprep.subr.mxu0 0.0
        %1604 = vmatpush1.msra.mxu0 0.0
        %1605 = vmatprep.subr.mxu0 0.0
        %1606 = vmatpush1.msra.mxu0 0.0
        %1607 = vmatprep.subr.mxu0 0.0
        %1608 = vmatpush1.msra.mxu0 0.0
        %1609 = vmatprep.subr.mxu0 0.0
        %1610 = vmatpush1.msra.mxu0 0.0
        %1611 = vmatprep.subr.mxu0 0.0
        %1612 = vmatpush1.msra.mxu0 0.0
        %1613 = vmatprep.subr.mxu0 0.0
        %1614 = vmatpush1.msra.mxu0 0.0
        %1615 = vmatprep.subr.mxu0 0.0
        %v1616 = vand.u32 %v754, 4294901760
        %v1617 = vsub.f32 %v754, %v1616
        %v1618 = vand.u32 %v1617, 4294901760
        %1619 = vmatpush1.msra.mxu0 %v1618
        %1620 = vmatprep.subr.mxu0 0.0
        %v1621 = vand.u32 %v753, 4294901760
        %v1622 = vsub.f32 %v753, %v1621
        %v1623 = vand.u32 %v1622, 4294901760
        %1624 = vmatpush1.msra.mxu0 %v1623
        %1625 = vmatprep.subr.mxu0 0.0
        %v1626 = vand.u32 %v752, 4294901760
        %v1627 = vsub.f32 %v752, %v1626
        %v1628 = vand.u32 %v1627, 4294901760
        %1629 = vmatpush1.msra.mxu0 %v1628
        %1630 = vmatprep.subr.mxu0 0.0
        %v1631 = vand.u32 %v751, 4294901760
        %v1632 = vsub.f32 %v751, %v1631
        %v1633 = vand.u32 %v1632, 4294901760
        %1634 = vmatpush1.msra.mxu0 %v1633
        %1635 = vmatprep.subr.mxu0 0.0
        %v1636 = vand.u32 %v750, 4294901760
        %v1637 = vsub.f32 %v750, %v1636
        %v1638 = vand.u32 %v1637, 4294901760
        %1639 = vmatpush1.msra.mxu0 %v1638
        %1640 = vmatprep.subr.mxu0 0.0
        %1641 = vmatpush2.msra.mxu0 0.0
        %1642 = vmatprep.subr.mxu0 0.0
        %1643 = vmatpush2.msra.mxu0 0.0
        %1644 = vmatprep.subr.mxu0 0.0
        %1645 = vmatpush2.msra.mxu0 0.0
        %1646 = vmatprep.subr.mxu0 0.0
        %1647 = vmatpush2.msra.mxu0 0.0
        %1648 = vmatprep.subr.mxu0 0.0
        %1649 = vmatpush2.msra.mxu0 0.0
        %1650 = vmatprep.subr.mxu0 0.0
        %1651 = vmatpush2.msra.mxu0 0.0
        %1652 = vmatprep.subr.mxu0 0.0
        %1653 = vmatpush2.msra.mxu0 0.0
        %1654 = vmatprep.subr.mxu0 0.0
        %1655 = vmatpush2.msra.mxu0 0.0
        %1656 = vmatprep.subr.mxu0 0.0
        %1657 = vmatpush2.msra.mxu0 0.0
        %1658 = vmatprep.subr.mxu0 0.0
        %1659 = vmatpush2.msra.mxu0 0.0
        %1660 = vmatprep.subr.mxu0 0.0
        %1661 = vmatpush2.msra.mxu0 0.0
        %1662 = vmatprep.subr.mxu0 0.0
        %1663 = vmatpush2.msra.mxu0 0.0
        %1664 = vmatprep.subr.mxu0 0.0
        %1665 = vmatpush2.msra.mxu0 0.0
        %1666 = vmatprep.subr.mxu0 0.0
        %1667 = vmatpush2.msra.mxu0 0.0
        %1668 = vmatprep.subr.mxu0 0.0
        %1669 = vmatpush2.msra.mxu0 0.0
        %1670 = vmatprep.subr.mxu0 0.0
        %1671 = vmatpush2.msra.mxu0 0.0
        %1672 = vmatprep.mubr.f32.mxu0 0.0
        %v1673 = vand.u32 %v1255, 4294901760
        %1674 = vmatmul.mubr.f32.gmra.mxu0 %v1673
        %v1675 = vpop.f32.mrf.mxu0
        %v1676 = vadd.f32 %v1590, %v1675
        %v1677 = vpop.f32.mrf.mxu0
        %1678 = vdwg.mxu0
        %1679 = vmatprep.subr.mxu0 0.0
        %1680 = vmatpush1.msra.mxu0 0.0
        %1681 = vmatprep.subr.mxu0 0.0
        %1682 = vmatpush1.msra.mxu0 0.0
        %1683 = vmatprep.subr.mxu0 0.0
        %1684 = vmatpush1.msra.mxu0 0.0
        %1685 = vmatprep.subr.mxu0 0.0
        %1686 = vmatpush1.msra.mxu0 0.0
        %1687 = vmatprep.subr.mxu0 0.0
        %1688 = vmatpush1.msra.mxu0 0.0
        %1689 = vmatprep.subr.mxu0 0.0
        %1690 = vmatpush1.msra.mxu0 0.0
        %1691 = vmatprep.subr.mxu0 0.0
        %1692 = vmatpush1.msra.mxu0 0.0
        %1693 = vmatprep.subr.mxu0 0.0
        %1694 = vmatpush1.msra.mxu0 0.0
        %1695 = vmatprep.subr.mxu0 0.0
        %1696 = vmatpush1.msra.mxu0 0.0
        %1697 = vmatprep.subr.mxu0 0.0
        %1698 = vmatpush1.msra.mxu0 0.0
        %1699 = vmatprep.subr.mxu0 0.0
        %1700 = vmatpush1.msra.mxu0 0.0
        %1701 = vmatprep.subr.mxu0 0.0
        %v1702 = vand.u32 %v754, 4294901760
        %1703 = vmatpush1.msra.mxu0 %v1702
        %1704 = vmatprep.subr.mxu0 0.0
        %v1705 = vand.u32 %v753, 4294901760
        %1706 = vmatpush1.msra.mxu0 %v1705
        %1707 = vmatprep.subr.mxu0 0.0
        %v1708 = vand.u32 %v752, 4294901760
        %1709 = vmatpush1.msra.mxu0 %v1708
        %1710 = vmatprep.subr.mxu0 0.0
        %v1711 = vand.u32 %v751, 4294901760
        %1712 = vmatpush1.msra.mxu0 %v1711
        %1713 = vmatprep.subr.mxu0 0.0
        %v1714 = vand.u32 %v750, 4294901760
        %1715 = vmatpush1.msra.mxu0 %v1714
        %1716 = vmatprep.subr.mxu0 0.0
        %1717 = vmatpush2.msra.mxu0 0.0
        %1718 = vmatprep.subr.mxu0 0.0
        %1719 = vmatpush2.msra.mxu0 0.0
        %1720 = vmatprep.subr.mxu0 0.0
        %1721 = vmatpush2.msra.mxu0 0.0
        %1722 = vmatprep.subr.mxu0 0.0
        %1723 = vmatpush2.msra.mxu0 0.0
        %1724 = vmatprep.subr.mxu0 0.0
        %1725 = vmatpush2.msra.mxu0 0.0
        %1726 = vmatprep.subr.mxu0 0.0
        %1727 = vmatpush2.msra.mxu0 0.0
        %1728 = vmatprep.subr.mxu0 0.0
        %1729 = vmatpush2.msra.mxu0 0.0
        %1730 = vmatprep.subr.mxu0 0.0
        %1731 = vmatpush2.msra.mxu0 0.0
        %1732 = vmatprep.subr.mxu0 0.0
        %1733 = vmatpush2.msra.mxu0 0.0
        %1734 = vmatprep.subr.mxu0 0.0
        %1735 = vmatpush2.msra.mxu0 0.0
        %1736 = vmatprep.subr.mxu0 0.0
        %1737 = vmatpush2.msra.mxu0 0.0
        %1738 = vmatprep.subr.mxu0 0.0
        %1739 = vmatpush2.msra.mxu0 0.0
        %1740 = vmatprep.subr.mxu0 0.0
        %1741 = vmatpush2.msra.mxu0 0.0
        %1742 = vmatprep.subr.mxu0 0.0
        %1743 = vmatpush2.msra.mxu0 0.0
        %1744 = vmatprep.subr.mxu0 0.0
        %1745 = vmatpush2.msra.mxu0 0.0
        %1746 = vmatprep.subr.mxu0 0.0
        %1747 = vmatpush2.msra.mxu0 0.0
        %1748 = vmatprep.mubr.f32.mxu0 0.0
        %v1749 = vand.u32 %v1255, 4294901760
        %1750 = vmatmul.mubr.f32.gmra.mxu0 %v1749
        %v1751 = vpop.f32.mrf.mxu0
        %v1752 = vadd.f32 %v1676, %v1751
        %v1753 = vpop.f32.mrf.mxu0
        %1754 = vdwg.mxu0
        %v1755 = vmul.f32 %v1250, %v1250
        %v1756 = vsub.f32 %v1752, %v1755
        %v1757 = vadd.f32 %v1756, 1e-05
        %v1758 = vrsqrt.pop %v1757
        %v1759 = vmul.f32 %v1758, %v747
        %v1760 = vld [vmem:[%s3] sm:$0x1]
        %v1762 = vlaneseq
        %v1763 = vshrl.u32 %v1762, 7
        %v1764 = vsub.s32 0, %v1763
        %v1765 = vrot.slane %v1760, %v1764
        %v1767 = vadd.f32 %v1759, %v1765
        %v1768 = vadd.f32 %v1767, %v242
        %1769 = vst.msk [vmem:[%s241] sm:$0xff] %vm248, %v1768
        %s1770 = sand.u32 %s119, 1
        %s1771 = scalar_lea.sflag [#allocation4], %s1770
        %s1772 = sand.u32 %s119, 1
        %s1773 = smul.addr %s1772, 8
        %s1774 = scalar_lea.vmem [#allocation8], %s1773
        // Predicated region
        $region49: #{tpu_custom_call.1} parent=35 // pred_check
          %p1775 = pneg %p129
        $region50: #{tpu_custom_call.1} parent=35 // pred_check_branch
          %1777 = sbr.rel (%p1775) target = $region52
        $region51: #{tpu_custom_call.1} parent=35 // pred_region
          %s1779 = ssub.s32 128, 128
          %1780 = vsyncadd %s1771, %s1779
          %s1781 = smul.addr %s22, 128
          %s1782 = scalar_lea.hbm %s4, %s1781
          %s1784 = sshll.u32 %s1774, 4
          %s1785 = int_to_ptr.vmem [resolvable:$true] %s1784
          %1787 = dma.vmem_to_hbm [thread:$0]  %s1785, 128, %s1782, %s1771
        $region52: #{tpu_custom_call.1} parent=35 // pred_fallthru
          _
      $region36: #{tpu_custom_call.1} parent=5 // pred_fallthru
        _
      %p1788 = scmp.le.s32.totalorder 2, %s17
      // Predicated region
      $region53: #{tpu_custom_call.1} parent=5 // pred_check
        %p1789 = pneg %p1788
      $region54: #{tpu_custom_call.1} parent=5 // pred_check_branch
        %1791 = sbr.rel (%p1789) target = $region56
      $region55: #{tpu_custom_call.1} parent=5 // pred_region
        %s1792 = ssub.s32 %s17, 2
        // Predicated region
        $region57: #{tpu_custom_call.1} parent=55 // pred_check
          %p1793 = pneg %p135
        $region58: #{tpu_custom_call.1} parent=55 // pred_check_branch
          %1795 = sbr.rel (%p1793) target = $region60
        $region59: #{tpu_custom_call.1} parent=55 // pred_region
          %s1796 = sand.u32 %s120, 1
          %s1797 = scalar_lea.sflag [#allocation4], %s1796
          %s1798 = sand.u32 %s120, 1
          %s1799 = smul.addr %s1798, 8
          %s1800 = scalar_lea.vmem [#allocation8], %s1799
          %1801 = dma.done %s1797, 128
        $region60: #{tpu_custom_call.1} parent=55 // pred_fallthru
          _
      $region56: #{tpu_custom_call.1} parent=5 // pred_fallthru
        _
    $region6: #{tpu_custom_call.1} parent=1 // loop_footer
      %s21 = sadd.s32 1, %s17
    $region7: #{tpu_custom_call.1} parent=1 // loop_footer_branch
      %16 = sbr.rel target = $region3
    $region8: #{tpu_custom_call.1} parent=1 // loop_exit
      _
    %1802 = vsyncpa [#allocation3], 1
    %s1803 = scalar_lea.sflag [#allocation3], 1
    %1804 = vsyncpa %s1803, 1
    %1805 = vsyncpa [#allocation6], 1
    %1806 = vsyncpa [#allocation4], 1
    %s1807 = scalar_lea.sflag [#allocation4], 1
    %1808 = vsyncpa %s1807, 1

</llo_original>
